<compile_context>
chip_gen: v6e
topology: v6e:2x2x1
jax: 0.10.0
libtpu: 0.0.40
codegen_flags: <defaults>
</compile_context>

<pallas_src>
import jax
import jax.numpy as jnp
from jax.experimental import pallas as pl
from jax.experimental.pallas import tpu as pltpu


# ----------------------------------------------------------------------------
# Fused kernel: all LSTM layers + fc in one invocation (no grid).
# Kernel args: (x_ref, [w_ih_t, w_hh_t, bias] * L, w_fc_t, b_fc, out_ref)
# ----------------------------------------------------------------------------
def _make_forex_lstm_kernel(num_layers, S, B, H, O):
    def kernel(*refs):
        x_ref = refs[0]
        layer_refs = refs[1:1 + 3 * num_layers]
        wfc_ref = refs[1 + 3 * num_layers]
        bfc_ref = refs[2 + 3 * num_layers]
        out_ref = refs[3 + 3 * num_layers]

        # Load all weights once (tiny model => fully VMEM resident).
        w_ih = [layer_refs[3 * l][...] for l in range(num_layers)]      # (Din, 4H)
        w_hh = [layer_refs[3 * l + 1][...] for l in range(num_layers)]  # (H, 4H)
        bias = [layer_refs[3 * l + 2][...] for l in range(num_layers)]  # (1, 4H)
        # Hoisted bias broadcasts for layers >= 1 (layer 0's bias is folded
        # into the hoisted input projection below).
        bias_b = [None] + [jnp.broadcast_to(bias[l], (B, 4 * H))
                           for l in range(1, num_layers)]

        # ---- Hoist layer-0 input projection (+ bias) out of the recurrence.
        x = x_ref[...]                                                   # (S, B, Din)
        d_in = x.shape[-1]
        xp0 = (
            jnp.dot(x.reshape(S * B, d_in), w_ih[0],
                    preferred_element_type=jnp.float32)
            + bias[0]
        ).reshape(S, B, 4 * H)

        def gate_update(gates, c_prev):
            # One full-width sigmoid (EUP) over (B, 4H); tanh only on g slice.
            # PyTorch gate order [i, f, g, o].
            s = jax.nn.sigmoid(gates)
            i_g = s[:, 0 * H:1 * H]
            f_g = s[:, 1 * H:2 * H]
            o_g = s[:, 3 * H:4 * H]
            g_g = jnp.tanh(gates[:, 2 * H:3 * H])
            c_new = f_g * c_prev + i_g * g_g
            h_new = o_g * jnp.tanh(c_new)
            return h_new, c_new

        zero = jnp.zeros((B, H), jnp.float32)
        h = [zero] * num_layers
        c = [zero] * num_layers
        # xproj[l] (l >= 1): input projection h_{l-1,t} @ w_ih_l + b_l,
        # produced one wave ahead of its consumption (off every critical path).
        xproj = [None] * num_layers

        # ---- Wavefront over layers x time: wave w runs layer l at t = w - l.
        # Fully unrolled (S, L are small & static) so the LLO scheduler can
        # interleave the per-layer recurrences.
        for w in range(S + num_layers - 1):
            new_xproj = [None] * num_layers
            for l in range(num_layers):
                t = w - l
                if not (0 <= t < S):
                    continue
                gate_in = xp0[t] if l == 0 else xproj[l]
                gates = gate_in + jnp.dot(
                    h[l], w_hh[l], preferred_element_type=jnp.float32)
                h[l], c[l] = gate_update(gates, c[l])
                if l + 1 < num_layers:
                    # Pre-project this output for layer l+1's step at wave w+1.
                    new_xproj[l + 1] = (
                        jnp.dot(h[l], w_ih[l + 1],
                                preferred_element_type=jnp.float32)
                        + bias_b[l + 1])
            for l in range(1, num_layers):
                if new_xproj[l] is not None:
                    xproj[l] = new_xproj[l]

        # ---- Fused fc on h_T of the last layer (dropout = identity, eval mode).
        out_ref[...] = (
            jnp.dot(h[num_layers - 1], wfc_ref[...],
                    preferred_element_type=jnp.float32)
            + bfc_ref[...]
        ).astype(out_ref.dtype)

    return kernel


# ----------------------------------------------------------------------------
# Parameter init (matches PyTorch LSTM/Linear shapes; U(-1/sqrt(H), 1/sqrt(H)))
# ----------------------------------------------------------------------------
def init_params(key, input_dim, hidden_dim, num_layers, output_dim):
    params = {"layers": []}
    bound = 1.0 / (hidden_dim ** 0.5)
    for layer in range(num_layers):
        d_in = input_dim if layer == 0 else hidden_dim
        key, k1, k2, k3, k4 = jax.random.split(key, 5)
        w_ih = jax.random.uniform(k1, (4 * hidden_dim, d_in), jnp.float32, -bound, bound)
        w_hh = jax.random.uniform(k2, (4 * hidden_dim, hidden_dim), jnp.float32, -bound, bound)
        b_ih = jax.random.uniform(k3, (4 * hidden_dim,), jnp.float32, -bound, bound)
        b_hh = jax.random.uniform(k4, (4 * hidden_dim,), jnp.float32, -bound, bound)
        params["layers"].append(
            {
                "w_ih_t": w_ih.T,                        # (d_in, 4H)
                "w_hh_t": w_hh.T,                        # (H, 4H)
                "bias": (b_ih + b_hh)[None, :],          # (1, 4H)
            }
        )
    key, k5, k6 = jax.random.split(key, 3)
    fb = 1.0 / (hidden_dim ** 0.5)
    w_fc = jax.random.uniform(k5, (output_dim, hidden_dim), jnp.float32, -fb, fb)
    b_fc = jax.random.uniform(k6, (output_dim,), jnp.float32, -fb, fb)
    params["w_fc_t"] = w_fc.T          # (H, O)
    params["b_fc"] = b_fc[None, :]     # (1, O)
    return params


# ----------------------------------------------------------------------------
# Full forward (matches ForexLSTM.forward semantics, eval-mode dropout).
# ----------------------------------------------------------------------------
@jax.jit
def forex_lstm_forward(params, x):
    # x: (B, S, input_dim), batch_first like PyTorch -> time-major for the kernel
    x_tm = jnp.transpose(x, (1, 0, 2)).astype(jnp.float32)   # (S, B, Din)
    S, B, D = x_tm.shape
    num_layers = len(params["layers"])
    H = params["layers"][0]["w_hh_t"].shape[0]
    O = params["w_fc_t"].shape[1]

    flat_weights = []
    for lp in params["layers"]:
        flat_weights += [lp["w_ih_t"], lp["w_hh_t"], lp["bias"]]
    args = (x_tm, *flat_weights, params["w_fc_t"], params["b_fc"])

    # Rough cost hint for XLA scheduling around the fused call.
    flops = 2 * S * B * D * 4 * H                             # layer-0 x projection
    flops += 2 * num_layers * S * B * H * 4 * H               # h @ w_hh per step
    flops += 2 * (num_layers - 1) * S * B * H * 4 * H         # inter-layer projections
    flops += 2 * B * H * O                                    # fc
    transcendentals = num_layers * S * B * 6 * H              # sigmoid(4H) + 2*tanh(H)
    bytes_accessed = sum(int(a.size) * 4 for a in args) + B * O * 4

    vmem_spec = pl.BlockSpec(memory_space=pltpu.MemorySpace.VMEM)
    kernel = _make_forex_lstm_kernel(num_layers, S, B, H, O)
    return pl.pallas_call(
        kernel,
        out_shape=jax.ShapeDtypeStruct((B, O), jnp.float32),
        in_specs=[vmem_spec] * len(args),
        out_specs=vmem_spec,
        cost_estimate=pl.CostEstimate(
            flops=flops, transcendentals=transcendentals,
            bytes_accessed=bytes_accessed),
    )(*args)


# ----------------------------------------------------------------------------
# Pure-JAX reference for correctness.
# ----------------------------------------------------------------------------
def reference_forward(params, x):
    h_seq = jnp.transpose(x, (1, 0, 2)).astype(jnp.float32)  # (S, B, D)
    for lp in params["layers"]:
        B = h_seq.shape[1]
        H = lp["w_hh_t"].shape[0]

        def step(carry, x_t):
            h_prev, c_prev = carry
            gates = x_t @ lp["w_ih_t"] + h_prev @ lp["w_hh_t"] + lp["bias"]
            i_g = jax.nn.sigmoid(gates[:, 0 * H:1 * H])
            f_g = jax.nn.sigmoid(gates[:, 1 * H:2 * H])
            g_g = jnp.tanh(gates[:, 2 * H:3 * H])
            o_g = jax.nn.sigmoid(gates[:, 3 * H:4 * H])
            c_new = f_g * c_prev + i_g * g_g
            h_new = o_g * jnp.tanh(c_new)
            return (h_new, c_new), h_new

        init = (jnp.zeros((B, H), jnp.float32), jnp.zeros((B, H), jnp.float32))
        _, h_seq = jax.lax.scan(step, init, h_seq)
    return h_seq[-1] @ params["w_fc_t"] + params["b_fc"]


if __name__ == "__main__":
    # Small shapes consistent with the module's forward:
    # x: (batch=4, seq=8, input_dim=8); hidden_dim=32, num_layers=2, output_dim=1
    input_dim, hidden_dim, num_layers, output_dim = 8, 32, 2, 1
    batch, seq = 4, 8

    key = jax.random.PRNGKey(0)
    k_param, k_x = jax.random.split(key)
    params = init_params(k_param, input_dim, hidden_dim, num_layers, output_dim)
    x = jax.random.normal(k_x, (batch, seq, input_dim), dtype=jnp.float32)

    out = forex_lstm_forward(params, x)
    out = jax.block_until_ready(out)
    assert out.shape == (batch, output_dim), out.shape

    ref = jax.block_until_ready(reference_forward(params, x))
    assert jnp.allclose(out, ref, rtol=1e-4, atol=1e-4), (out, ref)

    print("KERNEL_OK")
</pallas_src>

<mosaic_0001>
module attributes {stable_mosaic.version = 11 : i64} {
  func.func @kernel(%arg0: memref<8x4x8xf32, #tpu.memory_space<vmem>>, %arg1: memref<8x128xf32, #tpu.memory_space<vmem>>, %arg2: memref<32x128xf32, #tpu.memory_space<vmem>>, %arg3: memref<1x128xf32, #tpu.memory_space<vmem>>, %arg4: memref<32x128xf32, #tpu.memory_space<vmem>>, %arg5: memref<32x128xf32, #tpu.memory_space<vmem>>, %arg6: memref<1x128xf32, #tpu.memory_space<vmem>>, %arg7: memref<32x1xf32, #tpu.memory_space<vmem>>, %arg8: memref<1x1xf32, #tpu.memory_space<vmem>>, %arg9: memref<4x1xf32, #tpu.memory_space<vmem>>) attributes {dimension_semantics = [], scalar_prefetch = 0 : i64, scratch_operands = 0 : i64, tpu.core_type = #tpu.core_type<tc>} {
    %c0 = arith.constant 0 : index
    %c0_0 = arith.constant 0 : index
    %0 = vector.load %arg1[%c0, %c0_0] : memref<8x128xf32, #tpu.memory_space<vmem>>, vector<8x128xf32>
    %c0_1 = arith.constant 0 : index
    %c0_2 = arith.constant 0 : index
    %1 = vector.load %arg4[%c0_1, %c0_2] : memref<32x128xf32, #tpu.memory_space<vmem>>, vector<32x128xf32>
    %c0_3 = arith.constant 0 : index
    %c0_4 = arith.constant 0 : index
    %2 = vector.load %arg2[%c0_3, %c0_4] : memref<32x128xf32, #tpu.memory_space<vmem>>, vector<32x128xf32>
    %c0_5 = arith.constant 0 : index
    %c0_6 = arith.constant 0 : index
    %3 = vector.load %arg5[%c0_5, %c0_6] : memref<32x128xf32, #tpu.memory_space<vmem>>, vector<32x128xf32>
    %c0_7 = arith.constant 0 : index
    %c0_8 = arith.constant 0 : index
    %4 = vector.load %arg3[%c0_7, %c0_8] : memref<1x128xf32, #tpu.memory_space<vmem>>, vector<1x128xf32>
    %c0_9 = arith.constant 0 : index
    %c0_10 = arith.constant 0 : index
    %5 = vector.load %arg6[%c0_9, %c0_10] : memref<1x128xf32, #tpu.memory_space<vmem>>, vector<1x128xf32>
    %6 = vector.shape_cast %5 : vector<1x128xf32> to vector<1x128xf32>
    %7 = vector.broadcast %6 : vector<1x128xf32> to vector<4x128xf32>
    %c0_11 = arith.constant 0 : index
    %c0_12 = arith.constant 0 : index
    %c0_13 = arith.constant 0 : index
    %8 = vector.load %arg0[%c0_11, %c0_12, %c0_13] : memref<8x4x8xf32, #tpu.memory_space<vmem>>, vector<8x4x8xf32>
    %9 = vector.shape_cast %8 : vector<8x4x8xf32> to vector<32x8xf32>
    %cst = arith.constant dense<0.000000e+00> : vector<32x128xf32>
    %10 = tpu.matmul %9, %0, %cst {dimension_numbers = #tpu.dot_dimension_numbers<[1], [0], [0], [1], [0, 0, 1, 1], [], []>} : vector<32x8xf32>, vector<8x128xf32>, vector<32x128xf32> -> vector<32x128xf32>
    %11 = vector.broadcast %4 : vector<1x128xf32> to vector<32x128xf32>
    %12 = arith.addf %10, %11 : vector<32x128xf32>
    %13 = vector.shape_cast %12 : vector<32x128xf32> to vector<8x4x128xf32>
    %cst_14 = arith.constant 0.000000e+00 : f32
    %14 = vector.broadcast %cst_14 : f32 to vector<4x32xf32>
    %15 = vector.extract_strided_slice %13 {offsets = [0, 0, 0], sizes = [1, 4, 128], strides = [1, 1, 1]} : vector<8x4x128xf32> to vector<1x4x128xf32>
    %16 = vector.shape_cast %15 : vector<1x4x128xf32> to vector<4x128xf32>
    %cst_15 = arith.constant dense<0.000000e+00> : vector<4x128xf32>
    %17 = tpu.matmul %14, %2, %cst_15 {dimension_numbers = #tpu.dot_dimension_numbers<[1], [0], [0], [1], [0, 0, 1, 1], [], []>} : vector<4x32xf32>, vector<32x128xf32>, vector<4x128xf32> -> vector<4x128xf32>
    %18 = arith.addf %16, %17 : vector<4x128xf32>
    %19 = arith.negf %18 : vector<4x128xf32>
    %20 = math.exp %19 : vector<4x128xf32>
    %cst_16 = arith.constant 1.000000e+00 : f32
    %21 = vector.broadcast %cst_16 : f32 to vector<4x128xf32>
    %22 = arith.addf %21, %20 : vector<4x128xf32>
    %23 = arith.divf %21, %22 : vector<4x128xf32>
    %24 = vector.extract_strided_slice %23 {offsets = [0, 0], sizes = [4, 32], strides = [1, 1]} : vector<4x128xf32> to vector<4x32xf32>
    %25 = vector.extract_strided_slice %23 {offsets = [0, 32], sizes = [4, 32], strides = [1, 1]} : vector<4x128xf32> to vector<4x32xf32>
    %26 = vector.extract_strided_slice %23 {offsets = [0, 96], sizes = [4, 32], strides = [1, 1]} : vector<4x128xf32> to vector<4x32xf32>
    %27 = vector.extract_strided_slice %18 {offsets = [0, 64], sizes = [4, 32], strides = [1, 1]} : vector<4x128xf32> to vector<4x32xf32>
    %28 = math.tanh %27 : vector<4x32xf32>
    %29 = arith.mulf %25, %14 : vector<4x32xf32>
    %30 = arith.mulf %24, %28 : vector<4x32xf32>
    %31 = arith.addf %29, %30 : vector<4x32xf32>
    %32 = math.tanh %31 : vector<4x32xf32>
    %33 = arith.mulf %26, %32 : vector<4x32xf32>
    %cst_17 = arith.constant dense<0.000000e+00> : vector<4x128xf32>
    %34 = tpu.matmul %33, %1, %cst_17 {dimension_numbers = #tpu.dot_dimension_numbers<[1], [0], [0], [1], [0, 0, 1, 1], [], []>} : vector<4x32xf32>, vector<32x128xf32>, vector<4x128xf32> -> vector<4x128xf32>
    %35 = arith.addf %34, %7 : vector<4x128xf32>
    %36 = vector.extract_strided_slice %13 {offsets = [1, 0, 0], sizes = [1, 4, 128], strides = [1, 1, 1]} : vector<8x4x128xf32> to vector<1x4x128xf32>
    %37 = vector.shape_cast %36 : vector<1x4x128xf32> to vector<4x128xf32>
    %cst_18 = arith.constant dense<0.000000e+00> : vector<4x128xf32>
    %38 = tpu.matmul %33, %2, %cst_18 {dimension_numbers = #tpu.dot_dimension_numbers<[1], [0], [0], [1], [0, 0, 1, 1], [], []>} : vector<4x32xf32>, vector<32x128xf32>, vector<4x128xf32> -> vector<4x128xf32>
    %39 = arith.addf %37, %38 : vector<4x128xf32>
    %40 = arith.negf %39 : vector<4x128xf32>
    %41 = math.exp %40 : vector<4x128xf32>
    %cst_19 = arith.constant 1.000000e+00 : f32
    %42 = vector.broadcast %cst_19 : f32 to vector<4x128xf32>
    %43 = arith.addf %42, %41 : vector<4x128xf32>
    %44 = arith.divf %42, %43 : vector<4x128xf32>
    %45 = vector.extract_strided_slice %44 {offsets = [0, 0], sizes = [4, 32], strides = [1, 1]} : vector<4x128xf32> to vector<4x32xf32>
    %46 = vector.extract_strided_slice %44 {offsets = [0, 32], sizes = [4, 32], strides = [1, 1]} : vector<4x128xf32> to vector<4x32xf32>
    %47 = vector.extract_strided_slice %44 {offsets = [0, 96], sizes = [4, 32], strides = [1, 1]} : vector<4x128xf32> to vector<4x32xf32>
    %48 = vector.extract_strided_slice %39 {offsets = [0, 64], sizes = [4, 32], strides = [1, 1]} : vector<4x128xf32> to vector<4x32xf32>
    %49 = math.tanh %48 : vector<4x32xf32>
    %50 = arith.mulf %46, %31 : vector<4x32xf32>
    %51 = arith.mulf %45, %49 : vector<4x32xf32>
    %52 = arith.addf %50, %51 : vector<4x32xf32>
    %53 = math.tanh %52 : vector<4x32xf32>
    %54 = arith.mulf %47, %53 : vector<4x32xf32>
    %cst_20 = arith.constant dense<0.000000e+00> : vector<4x128xf32>
    %55 = tpu.matmul %54, %1, %cst_20 {dimension_numbers = #tpu.dot_dimension_numbers<[1], [0], [0], [1], [0, 0, 1, 1], [], []>} : vector<4x32xf32>, vector<32x128xf32>, vector<4x128xf32> -> vector<4x128xf32>
    %56 = arith.addf %55, %7 : vector<4x128xf32>
    %cst_21 = arith.constant dense<0.000000e+00> : vector<4x128xf32>
    %57 = tpu.matmul %14, %3, %cst_21 {dimension_numbers = #tpu.dot_dimension_numbers<[1], [0], [0], [1], [0, 0, 1, 1], [], []>} : vector<4x32xf32>, vector<32x128xf32>, vector<4x128xf32> -> vector<4x128xf32>
    %58 = arith.addf %35, %57 : vector<4x128xf32>
    %59 = arith.negf %58 : vector<4x128xf32>
    %60 = math.exp %59 : vector<4x128xf32>
    %cst_22 = arith.constant 1.000000e+00 : f32
    %61 = vector.broadcast %cst_22 : f32 to vector<4x128xf32>
    %62 = arith.addf %61, %60 : vector<4x128xf32>
    %63 = arith.divf %61, %62 : vector<4x128xf32>
    %64 = vector.extract_strided_slice %63 {offsets = [0, 0], sizes = [4, 32], strides = [1, 1]} : vector<4x128xf32> to vector<4x32xf32>
    %65 = vector.extract_strided_slice %63 {offsets = [0, 32], sizes = [4, 32], strides = [1, 1]} : vector<4x128xf32> to vector<4x32xf32>
    %66 = vector.extract_strided_slice %63 {offsets = [0, 96], sizes = [4, 32], strides = [1, 1]} : vector<4x128xf32> to vector<4x32xf32>
    %67 = vector.extract_strided_slice %58 {offsets = [0, 64], sizes = [4, 32], strides = [1, 1]} : vector<4x128xf32> to vector<4x32xf32>
    %68 = math.tanh %67 : vector<4x32xf32>
    %69 = arith.mulf %65, %14 : vector<4x32xf32>
    %70 = arith.mulf %64, %68 : vector<4x32xf32>
    %71 = arith.addf %69, %70 : vector<4x32xf32>
    %72 = math.tanh %71 : vector<4x32xf32>
    %73 = arith.mulf %66, %72 : vector<4x32xf32>
    %74 = vector.extract_strided_slice %13 {offsets = [2, 0, 0], sizes = [1, 4, 128], strides = [1, 1, 1]} : vector<8x4x128xf32> to vector<1x4x128xf32>
    %75 = vector.shape_cast %74 : vector<1x4x128xf32> to vector<4x128xf32>
    %cst_23 = arith.constant dense<0.000000e+00> : vector<4x128xf32>
    %76 = tpu.matmul %54, %2, %cst_23 {dimension_numbers = #tpu.dot_dimension_numbers<[1], [0], [0], [1], [0, 0, 1, 1], [], []>} : vector<4x32xf32>, vector<32x128xf32>, vector<4x128xf32> -> vector<4x128xf32>
    %77 = arith.addf %75, %76 : vector<4x128xf32>
    %78 = arith.negf %77 : vector<4x128xf32>
    %79 = math.exp %78 : vector<4x128xf32>
    %cst_24 = arith.constant 1.000000e+00 : f32
    %80 = vector.broadcast %cst_24 : f32 to vector<4x128xf32>
    %81 = arith.addf %80, %79 : vector<4x128xf32>
    %82 = arith.divf %80, %81 : vector<4x128xf32>
    %83 = vector.extract_strided_slice %82 {offsets = [0, 0], sizes = [4, 32], strides = [1, 1]} : vector<4x128xf32> to vector<4x32xf32>
    %84 = vector.extract_strided_slice %82 {offsets = [0, 32], sizes = [4, 32], strides = [1, 1]} : vector<4x128xf32> to vector<4x32xf32>
    %85 = vector.extract_strided_slice %82 {offsets = [0, 96], sizes = [4, 32], strides = [1, 1]} : vector<4x128xf32> to vector<4x32xf32>
    %86 = vector.extract_strided_slice %77 {offsets = [0, 64], sizes = [4, 32], strides = [1, 1]} : vector<4x128xf32> to vector<4x32xf32>
    %87 = math.tanh %86 : vector<4x32xf32>
    %88 = arith.mulf %84, %52 : vector<4x32xf32>
    %89 = arith.mulf %83, %87 : vector<4x32xf32>
    %90 = arith.addf %88, %89 : vector<4x32xf32>
    %91 = math.tanh %90 : vector<4x32xf32>
    %92 = arith.mulf %85, %91 : vector<4x32xf32>
    %cst_25 = arith.constant dense<0.000000e+00> : vector<4x128xf32>
    %93 = tpu.matmul %92, %1, %cst_25 {dimension_numbers = #tpu.dot_dimension_numbers<[1], [0], [0], [1], [0, 0, 1, 1], [], []>} : vector<4x32xf32>, vector<32x128xf32>, vector<4x128xf32> -> vector<4x128xf32>
    %94 = arith.addf %93, %7 : vector<4x128xf32>
    %cst_26 = arith.constant dense<0.000000e+00> : vector<4x128xf32>
    %95 = tpu.matmul %73, %3, %cst_26 {dimension_numbers = #tpu.dot_dimension_numbers<[1], [0], [0], [1], [0, 0, 1, 1], [], []>} : vector<4x32xf32>, vector<32x128xf32>, vector<4x128xf32> -> vector<4x128xf32>
    %96 = arith.addf %56, %95 : vector<4x128xf32>
    %97 = arith.negf %96 : vector<4x128xf32>
    %98 = math.exp %97 : vector<4x128xf32>
    %cst_27 = arith.constant 1.000000e+00 : f32
    %99 = vector.broadcast %cst_27 : f32 to vector<4x128xf32>
    %100 = arith.addf %99, %98 : vector<4x128xf32>
    %101 = arith.divf %99, %100 : vector<4x128xf32>
    %102 = vector.extract_strided_slice %101 {offsets = [0, 0], sizes = [4, 32], strides = [1, 1]} : vector<4x128xf32> to vector<4x32xf32>
    %103 = vector.extract_strided_slice %101 {offsets = [0, 32], sizes = [4, 32], strides = [1, 1]} : vector<4x128xf32> to vector<4x32xf32>
    %104 = vector.extract_strided_slice %101 {offsets = [0, 96], sizes = [4, 32], strides = [1, 1]} : vector<4x128xf32> to vector<4x32xf32>
    %105 = vector.extract_strided_slice %96 {offsets = [0, 64], sizes = [4, 32], strides = [1, 1]} : vector<4x128xf32> to vector<4x32xf32>
    %106 = math.tanh %105 : vector<4x32xf32>
    %107 = arith.mulf %103, %71 : vector<4x32xf32>
    %108 = arith.mulf %102, %106 : vector<4x32xf32>
    %109 = arith.addf %107, %108 : vector<4x32xf32>
    %110 = math.tanh %109 : vector<4x32xf32>
    %111 = arith.mulf %104, %110 : vector<4x32xf32>
    %112 = vector.extract_strided_slice %13 {offsets = [3, 0, 0], sizes = [1, 4, 128], strides = [1, 1, 1]} : vector<8x4x128xf32> to vector<1x4x128xf32>
    %113 = vector.shape_cast %112 : vector<1x4x128xf32> to vector<4x128xf32>
    %cst_28 = arith.constant dense<0.000000e+00> : vector<4x128xf32>
    %114 = tpu.matmul %92, %2, %cst_28 {dimension_numbers = #tpu.dot_dimension_numbers<[1], [0], [0], [1], [0, 0, 1, 1], [], []>} : vector<4x32xf32>, vector<32x128xf32>, vector<4x128xf32> -> vector<4x128xf32>
    %115 = arith.addf %113, %114 : vector<4x128xf32>
    %116 = arith.negf %115 : vector<4x128xf32>
    %117 = math.exp %116 : vector<4x128xf32>
    %cst_29 = arith.constant 1.000000e+00 : f32
    %118 = vector.broadcast %cst_29 : f32 to vector<4x128xf32>
    %119 = arith.addf %118, %117 : vector<4x128xf32>
    %120 = arith.divf %118, %119 : vector<4x128xf32>
    %121 = vector.extract_strided_slice %120 {offsets = [0, 0], sizes = [4, 32], strides = [1, 1]} : vector<4x128xf32> to vector<4x32xf32>
    %122 = vector.extract_strided_slice %120 {offsets = [0, 32], sizes = [4, 32], strides = [1, 1]} : vector<4x128xf32> to vector<4x32xf32>
    %123 = vector.extract_strided_slice %120 {offsets = [0, 96], sizes = [4, 32], strides = [1, 1]} : vector<4x128xf32> to vector<4x32xf32>
    %124 = vector.extract_strided_slice %115 {offsets = [0, 64], sizes = [4, 32], strides = [1, 1]} : vector<4x128xf32> to vector<4x32xf32>
    %125 = math.tanh %124 : vector<4x32xf32>
    %126 = arith.mulf %122, %90 : vector<4x32xf32>
    %127 = arith.mulf %121, %125 : vector<4x32xf32>
    %128 = arith.addf %126, %127 : vector<4x32xf32>
    %129 = math.tanh %128 : vector<4x32xf32>
    %130 = arith.mulf %123, %129 : vector<4x32xf32>
    %cst_30 = arith.constant dense<0.000000e+00> : vector<4x128xf32>
    %131 = tpu.matmul %130, %1, %cst_30 {dimension_numbers = #tpu.dot_dimension_numbers<[1], [0], [0], [1], [0, 0, 1, 1], [], []>} : vector<4x32xf32>, vector<32x128xf32>, vector<4x128xf32> -> vector<4x128xf32>
    %132 = arith.addf %131, %7 : vector<4x128xf32>
    %cst_31 = arith.constant dense<0.000000e+00> : vector<4x128xf32>
    %133 = tpu.matmul %111, %3, %cst_31 {dimension_numbers = #tpu.dot_dimension_numbers<[1], [0], [0], [1], [0, 0, 1, 1], [], []>} : vector<4x32xf32>, vector<32x128xf32>, vector<4x128xf32> -> vector<4x128xf32>
    %134 = arith.addf %94, %133 : vector<4x128xf32>
    %135 = arith.negf %134 : vector<4x128xf32>
    %136 = math.exp %135 : vector<4x128xf32>
    %cst_32 = arith.constant 1.000000e+00 : f32
    %137 = vector.broadcast %cst_32 : f32 to vector<4x128xf32>
    %138 = arith.addf %137, %136 : vector<4x128xf32>
    %139 = arith.divf %137, %138 : vector<4x128xf32>
    %140 = vector.extract_strided_slice %139 {offsets = [0, 0], sizes = [4, 32], strides = [1, 1]} : vector<4x128xf32> to vector<4x32xf32>
    %141 = vector.extract_strided_slice %139 {offsets = [0, 32], sizes = [4, 32], strides = [1, 1]} : vector<4x128xf32> to vector<4x32xf32>
    %142 = vector.extract_strided_slice %139 {offsets = [0, 96], sizes = [4, 32], strides = [1, 1]} : vector<4x128xf32> to vector<4x32xf32>
    %143 = vector.extract_strided_slice %134 {offsets = [0, 64], sizes = [4, 32], strides = [1, 1]} : vector<4x128xf32> to vector<4x32xf32>
    %144 = math.tanh %143 : vector<4x32xf32>
    %145 = arith.mulf %141, %109 : vector<4x32xf32>
    %146 = arith.mulf %140, %144 : vector<4x32xf32>
    %147 = arith.addf %145, %146 : vector<4x32xf32>
    %148 = math.tanh %147 : vector<4x32xf32>
    %149 = arith.mulf %142, %148 : vector<4x32xf32>
    %150 = vector.extract_strided_slice %13 {offsets = [4, 0, 0], sizes = [1, 4, 128], strides = [1, 1, 1]} : vector<8x4x128xf32> to vector<1x4x128xf32>
    %151 = vector.shape_cast %150 : vector<1x4x128xf32> to vector<4x128xf32>
    %cst_33 = arith.constant dense<0.000000e+00> : vector<4x128xf32>
    %152 = tpu.matmul %130, %2, %cst_33 {dimension_numbers = #tpu.dot_dimension_numbers<[1], [0], [0], [1], [0, 0, 1, 1], [], []>} : vector<4x32xf32>, vector<32x128xf32>, vector<4x128xf32> -> vector<4x128xf32>
    %153 = arith.addf %151, %152 : vector<4x128xf32>
    %154 = arith.negf %153 : vector<4x128xf32>
    %155 = math.exp %154 : vector<4x128xf32>
    %cst_34 = arith.constant 1.000000e+00 : f32
    %156 = vector.broadcast %cst_34 : f32 to vector<4x128xf32>
    %157 = arith.addf %156, %155 : vector<4x128xf32>
    %158 = arith.divf %156, %157 : vector<4x128xf32>
    %159 = vector.extract_strided_slice %158 {offsets = [0, 0], sizes = [4, 32], strides = [1, 1]} : vector<4x128xf32> to vector<4x32xf32>
    %160 = vector.extract_strided_slice %158 {offsets = [0, 32], sizes = [4, 32], strides = [1, 1]} : vector<4x128xf32> to vector<4x32xf32>
    %161 = vector.extract_strided_slice %158 {offsets = [0, 96], sizes = [4, 32], strides = [1, 1]} : vector<4x128xf32> to vector<4x32xf32>
    %162 = vector.extract_strided_slice %153 {offsets = [0, 64], sizes = [4, 32], strides = [1, 1]} : vector<4x128xf32> to vector<4x32xf32>
    %163 = math.tanh %162 : vector<4x32xf32>
    %164 = arith.mulf %160, %128 : vector<4x32xf32>
    %165 = arith.mulf %159, %163 : vector<4x32xf32>
    %166 = arith.addf %164, %165 : vector<4x32xf32>
    %167 = math.tanh %166 : vector<4x32xf32>
    %168 = arith.mulf %161, %167 : vector<4x32xf32>
    %cst_35 = arith.constant dense<0.000000e+00> : vector<4x128xf32>
    %169 = tpu.matmul %168, %1, %cst_35 {dimension_numbers = #tpu.dot_dimension_numbers<[1], [0], [0], [1], [0, 0, 1, 1], [], []>} : vector<4x32xf32>, vector<32x128xf32>, vector<4x128xf32> -> vector<4x128xf32>
    %170 = arith.addf %169, %7 : vector<4x128xf32>
    %cst_36 = arith.constant dense<0.000000e+00> : vector<4x128xf32>
    %171 = tpu.matmul %149, %3, %cst_36 {dimension_numbers = #tpu.dot_dimension_numbers<[1], [0], [0], [1], [0, 0, 1, 1], [], []>} : vector<4x32xf32>, vector<32x128xf32>, vector<4x128xf32> -> vector<4x128xf32>
    %172 = arith.addf %132, %171 : vector<4x128xf32>
    %173 = arith.negf %172 : vector<4x128xf32>
    %174 = math.exp %173 : vector<4x128xf32>
    %cst_37 = arith.constant 1.000000e+00 : f32
    %175 = vector.broadcast %cst_37 : f32 to vector<4x128xf32>
    %176 = arith.addf %175, %174 : vector<4x128xf32>
    %177 = arith.divf %175, %176 : vector<4x128xf32>
    %178 = vector.extract_strided_slice %177 {offsets = [0, 0], sizes = [4, 32], strides = [1, 1]} : vector<4x128xf32> to vector<4x32xf32>
    %179 = vector.extract_strided_slice %177 {offsets = [0, 32], sizes = [4, 32], strides = [1, 1]} : vector<4x128xf32> to vector<4x32xf32>
    %180 = vector.extract_strided_slice %177 {offsets = [0, 96], sizes = [4, 32], strides = [1, 1]} : vector<4x128xf32> to vector<4x32xf32>
    %181 = vector.extract_strided_slice %172 {offsets = [0, 64], sizes = [4, 32], strides = [1, 1]} : vector<4x128xf32> to vector<4x32xf32>
    %182 = math.tanh %181 : vector<4x32xf32>
    %183 = arith.mulf %179, %147 : vector<4x32xf32>
    %184 = arith.mulf %178, %182 : vector<4x32xf32>
    %185 = arith.addf %183, %184 : vector<4x32xf32>
    %186 = math.tanh %185 : vector<4x32xf32>
    %187 = arith.mulf %180, %186 : vector<4x32xf32>
    %188 = vector.extract_strided_slice %13 {offsets = [5, 0, 0], sizes = [1, 4, 128], strides = [1, 1, 1]} : vector<8x4x128xf32> to vector<1x4x128xf32>
    %189 = vector.shape_cast %188 : vector<1x4x128xf32> to vector<4x128xf32>
    %cst_38 = arith.constant dense<0.000000e+00> : vector<4x128xf32>
    %190 = tpu.matmul %168, %2, %cst_38 {dimension_numbers = #tpu.dot_dimension_numbers<[1], [0], [0], [1], [0, 0, 1, 1], [], []>} : vector<4x32xf32>, vector<32x128xf32>, vector<4x128xf32> -> vector<4x128xf32>
    %191 = arith.addf %189, %190 : vector<4x128xf32>
    %192 = arith.negf %191 : vector<4x128xf32>
    %193 = math.exp %192 : vector<4x128xf32>
    %cst_39 = arith.constant 1.000000e+00 : f32
    %194 = vector.broadcast %cst_39 : f32 to vector<4x128xf32>
    %195 = arith.addf %194, %193 : vector<4x128xf32>
    %196 = arith.divf %194, %195 : vector<4x128xf32>
    %197 = vector.extract_strided_slice %196 {offsets = [0, 0], sizes = [4, 32], strides = [1, 1]} : vector<4x128xf32> to vector<4x32xf32>
    %198 = vector.extract_strided_slice %196 {offsets = [0, 32], sizes = [4, 32], strides = [1, 1]} : vector<4x128xf32> to vector<4x32xf32>
    %199 = vector.extract_strided_slice %196 {offsets = [0, 96], sizes = [4, 32], strides = [1, 1]} : vector<4x128xf32> to vector<4x32xf32>
    %200 = vector.extract_strided_slice %191 {offsets = [0, 64], sizes = [4, 32], strides = [1, 1]} : vector<4x128xf32> to vector<4x32xf32>
    %201 = math.tanh %200 : vector<4x32xf32>
    %202 = arith.mulf %198, %166 : vector<4x32xf32>
    %203 = arith.mulf %197, %201 : vector<4x32xf32>
    %204 = arith.addf %202, %203 : vector<4x32xf32>
    %205 = math.tanh %204 : vector<4x32xf32>
    %206 = arith.mulf %199, %205 : vector<4x32xf32>
    %cst_40 = arith.constant dense<0.000000e+00> : vector<4x128xf32>
    %207 = tpu.matmul %206, %1, %cst_40 {dimension_numbers = #tpu.dot_dimension_numbers<[1], [0], [0], [1], [0, 0, 1, 1], [], []>} : vector<4x32xf32>, vector<32x128xf32>, vector<4x128xf32> -> vector<4x128xf32>
    %208 = arith.addf %207, %7 : vector<4x128xf32>
    %cst_41 = arith.constant dense<0.000000e+00> : vector<4x128xf32>
    %209 = tpu.matmul %187, %3, %cst_41 {dimension_numbers = #tpu.dot_dimension_numbers<[1], [0], [0], [1], [0, 0, 1, 1], [], []>} : vector<4x32xf32>, vector<32x128xf32>, vector<4x128xf32> -> vector<4x128xf32>
    %210 = arith.addf %170, %209 : vector<4x128xf32>
    %211 = arith.negf %210 : vector<4x128xf32>
    %212 = math.exp %211 : vector<4x128xf32>
    %cst_42 = arith.constant 1.000000e+00 : f32
    %213 = vector.broadcast %cst_42 : f32 to vector<4x128xf32>
    %214 = arith.addf %213, %212 : vector<4x128xf32>
    %215 = arith.divf %213, %214 : vector<4x128xf32>
    %216 = vector.extract_strided_slice %215 {offsets = [0, 0], sizes = [4, 32], strides = [1, 1]} : vector<4x128xf32> to vector<4x32xf32>
    %217 = vector.extract_strided_slice %215 {offsets = [0, 32], sizes = [4, 32], strides = [1, 1]} : vector<4x128xf32> to vector<4x32xf32>
    %218 = vector.extract_strided_slice %215 {offsets = [0, 96], sizes = [4, 32], strides = [1, 1]} : vector<4x128xf32> to vector<4x32xf32>
    %219 = vector.extract_strided_slice %210 {offsets = [0, 64], sizes = [4, 32], strides = [1, 1]} : vector<4x128xf32> to vector<4x32xf32>
    %220 = math.tanh %219 : vector<4x32xf32>
    %221 = arith.mulf %217, %185 : vector<4x32xf32>
    %222 = arith.mulf %216, %220 : vector<4x32xf32>
    %223 = arith.addf %221, %222 : vector<4x32xf32>
    %224 = math.tanh %223 : vector<4x32xf32>
    %225 = arith.mulf %218, %224 : vector<4x32xf32>
    %226 = vector.extract_strided_slice %13 {offsets = [6, 0, 0], sizes = [1, 4, 128], strides = [1, 1, 1]} : vector<8x4x128xf32> to vector<1x4x128xf32>
    %227 = vector.shape_cast %226 : vector<1x4x128xf32> to vector<4x128xf32>
    %cst_43 = arith.constant dense<0.000000e+00> : vector<4x128xf32>
    %228 = tpu.matmul %206, %2, %cst_43 {dimension_numbers = #tpu.dot_dimension_numbers<[1], [0], [0], [1], [0, 0, 1, 1], [], []>} : vector<4x32xf32>, vector<32x128xf32>, vector<4x128xf32> -> vector<4x128xf32>
    %229 = arith.addf %227, %228 : vector<4x128xf32>
    %230 = arith.negf %229 : vector<4x128xf32>
    %231 = math.exp %230 : vector<4x128xf32>
    %cst_44 = arith.constant 1.000000e+00 : f32
    %232 = vector.broadcast %cst_44 : f32 to vector<4x128xf32>
    %233 = arith.addf %232, %231 : vector<4x128xf32>
    %234 = arith.divf %232, %233 : vector<4x128xf32>
    %235 = vector.extract_strided_slice %234 {offsets = [0, 0], sizes = [4, 32], strides = [1, 1]} : vector<4x128xf32> to vector<4x32xf32>
    %236 = vector.extract_strided_slice %234 {offsets = [0, 32], sizes = [4, 32], strides = [1, 1]} : vector<4x128xf32> to vector<4x32xf32>
    %237 = vector.extract_strided_slice %234 {offsets = [0, 96], sizes = [4, 32], strides = [1, 1]} : vector<4x128xf32> to vector<4x32xf32>
    %238 = vector.extract_strided_slice %229 {offsets = [0, 64], sizes = [4, 32], strides = [1, 1]} : vector<4x128xf32> to vector<4x32xf32>
    %239 = math.tanh %238 : vector<4x32xf32>
    %240 = arith.mulf %236, %204 : vector<4x32xf32>
    %241 = arith.mulf %235, %239 : vector<4x32xf32>
    %242 = arith.addf %240, %241 : vector<4x32xf32>
    %243 = math.tanh %242 : vector<4x32xf32>
    %244 = arith.mulf %237, %243 : vector<4x32xf32>
    %cst_45 = arith.constant dense<0.000000e+00> : vector<4x128xf32>
    %245 = tpu.matmul %244, %1, %cst_45 {dimension_numbers = #tpu.dot_dimension_numbers<[1], [0], [0], [1], [0, 0, 1, 1], [], []>} : vector<4x32xf32>, vector<32x128xf32>, vector<4x128xf32> -> vector<4x128xf32>
    %246 = arith.addf %245, %7 : vector<4x128xf32>
    %cst_46 = arith.constant dense<0.000000e+00> : vector<4x128xf32>
    %247 = tpu.matmul %225, %3, %cst_46 {dimension_numbers = #tpu.dot_dimension_numbers<[1], [0], [0], [1], [0, 0, 1, 1], [], []>} : vector<4x32xf32>, vector<32x128xf32>, vector<4x128xf32> -> vector<4x128xf32>
    %248 = arith.addf %208, %247 : vector<4x128xf32>
    %249 = arith.negf %248 : vector<4x128xf32>
    %250 = math.exp %249 : vector<4x128xf32>
    %cst_47 = arith.constant 1.000000e+00 : f32
    %251 = vector.broadcast %cst_47 : f32 to vector<4x128xf32>
    %252 = arith.addf %251, %250 : vector<4x128xf32>
    %253 = arith.divf %251, %252 : vector<4x128xf32>
    %254 = vector.extract_strided_slice %253 {offsets = [0, 0], sizes = [4, 32], strides = [1, 1]} : vector<4x128xf32> to vector<4x32xf32>
    %255 = vector.extract_strided_slice %253 {offsets = [0, 32], sizes = [4, 32], strides = [1, 1]} : vector<4x128xf32> to vector<4x32xf32>
    %256 = vector.extract_strided_slice %253 {offsets = [0, 96], sizes = [4, 32], strides = [1, 1]} : vector<4x128xf32> to vector<4x32xf32>
    %257 = vector.extract_strided_slice %248 {offsets = [0, 64], sizes = [4, 32], strides = [1, 1]} : vector<4x128xf32> to vector<4x32xf32>
    %258 = math.tanh %257 : vector<4x32xf32>
    %259 = arith.mulf %255, %223 : vector<4x32xf32>
    %260 = arith.mulf %254, %258 : vector<4x32xf32>
    %261 = arith.addf %259, %260 : vector<4x32xf32>
    %262 = math.tanh %261 : vector<4x32xf32>
    %263 = arith.mulf %256, %262 : vector<4x32xf32>
    %264 = vector.extract_strided_slice %13 {offsets = [7, 0, 0], sizes = [1, 4, 128], strides = [1, 1, 1]} : vector<8x4x128xf32> to vector<1x4x128xf32>
    %265 = vector.shape_cast %264 : vector<1x4x128xf32> to vector<4x128xf32>
    %cst_48 = arith.constant dense<0.000000e+00> : vector<4x128xf32>
    %266 = tpu.matmul %244, %2, %cst_48 {dimension_numbers = #tpu.dot_dimension_numbers<[1], [0], [0], [1], [0, 0, 1, 1], [], []>} : vector<4x32xf32>, vector<32x128xf32>, vector<4x128xf32> -> vector<4x128xf32>
    %267 = arith.addf %265, %266 : vector<4x128xf32>
    %268 = arith.negf %267 : vector<4x128xf32>
    %269 = math.exp %268 : vector<4x128xf32>
    %cst_49 = arith.constant 1.000000e+00 : f32
    %270 = vector.broadcast %cst_49 : f32 to vector<4x128xf32>
    %271 = arith.addf %270, %269 : vector<4x128xf32>
    %272 = arith.divf %270, %271 : vector<4x128xf32>
    %273 = vector.extract_strided_slice %272 {offsets = [0, 0], sizes = [4, 32], strides = [1, 1]} : vector<4x128xf32> to vector<4x32xf32>
    %274 = vector.extract_strided_slice %272 {offsets = [0, 32], sizes = [4, 32], strides = [1, 1]} : vector<4x128xf32> to vector<4x32xf32>
    %275 = vector.extract_strided_slice %272 {offsets = [0, 96], sizes = [4, 32], strides = [1, 1]} : vector<4x128xf32> to vector<4x32xf32>
    %276 = vector.extract_strided_slice %267 {offsets = [0, 64], sizes = [4, 32], strides = [1, 1]} : vector<4x128xf32> to vector<4x32xf32>
    %277 = math.tanh %276 : vector<4x32xf32>
    %278 = arith.mulf %274, %242 : vector<4x32xf32>
    %279 = arith.mulf %273, %277 : vector<4x32xf32>
    %280 = arith.addf %278, %279 : vector<4x32xf32>
    %281 = math.tanh %280 : vector<4x32xf32>
    %282 = arith.mulf %275, %281 : vector<4x32xf32>
    %cst_50 = arith.constant dense<0.000000e+00> : vector<4x128xf32>
    %283 = tpu.matmul %282, %1, %cst_50 {dimension_numbers = #tpu.dot_dimension_numbers<[1], [0], [0], [1], [0, 0, 1, 1], [], []>} : vector<4x32xf32>, vector<32x128xf32>, vector<4x128xf32> -> vector<4x128xf32>
    %284 = arith.addf %283, %7 : vector<4x128xf32>
    %cst_51 = arith.constant dense<0.000000e+00> : vector<4x128xf32>
    %285 = tpu.matmul %263, %3, %cst_51 {dimension_numbers = #tpu.dot_dimension_numbers<[1], [0], [0], [1], [0, 0, 1, 1], [], []>} : vector<4x32xf32>, vector<32x128xf32>, vector<4x128xf32> -> vector<4x128xf32>
    %286 = arith.addf %246, %285 : vector<4x128xf32>
    %287 = arith.negf %286 : vector<4x128xf32>
    %288 = math.exp %287 : vector<4x128xf32>
    %cst_52 = arith.constant 1.000000e+00 : f32
    %289 = vector.broadcast %cst_52 : f32 to vector<4x128xf32>
    %290 = arith.addf %289, %288 : vector<4x128xf32>
    %291 = arith.divf %289, %290 : vector<4x128xf32>
    %292 = vector.extract_strided_slice %291 {offsets = [0, 0], sizes = [4, 32], strides = [1, 1]} : vector<4x128xf32> to vector<4x32xf32>
    %293 = vector.extract_strided_slice %291 {offsets = [0, 32], sizes = [4, 32], strides = [1, 1]} : vector<4x128xf32> to vector<4x32xf32>
    %294 = vector.extract_strided_slice %291 {offsets = [0, 96], sizes = [4, 32], strides = [1, 1]} : vector<4x128xf32> to vector<4x32xf32>
    %295 = vector.extract_strided_slice %286 {offsets = [0, 64], sizes = [4, 32], strides = [1, 1]} : vector<4x128xf32> to vector<4x32xf32>
    %296 = math.tanh %295 : vector<4x32xf32>
    %297 = arith.mulf %293, %261 : vector<4x32xf32>
    %298 = arith.mulf %292, %296 : vector<4x32xf32>
    %299 = arith.addf %297, %298 : vector<4x32xf32>
    %300 = math.tanh %299 : vector<4x32xf32>
    %301 = arith.mulf %294, %300 : vector<4x32xf32>
    %cst_53 = arith.constant dense<0.000000e+00> : vector<4x128xf32>
    %302 = tpu.matmul %301, %3, %cst_53 {dimension_numbers = #tpu.dot_dimension_numbers<[1], [0], [0], [1], [0, 0, 1, 1], [], []>} : vector<4x32xf32>, vector<32x128xf32>, vector<4x128xf32> -> vector<4x128xf32>
    %303 = arith.addf %284, %302 : vector<4x128xf32>
    %304 = arith.negf %303 : vector<4x128xf32>
    %305 = math.exp %304 : vector<4x128xf32>
    %cst_54 = arith.constant 1.000000e+00 : f32
    %306 = vector.broadcast %cst_54 : f32 to vector<4x128xf32>
    %307 = arith.addf %306, %305 : vector<4x128xf32>
    %308 = arith.divf %306, %307 : vector<4x128xf32>
    %309 = vector.extract_strided_slice %308 {offsets = [0, 0], sizes = [4, 32], strides = [1, 1]} : vector<4x128xf32> to vector<4x32xf32>
    %310 = vector.extract_strided_slice %308 {offsets = [0, 32], sizes = [4, 32], strides = [1, 1]} : vector<4x128xf32> to vector<4x32xf32>
    %311 = vector.extract_strided_slice %308 {offsets = [0, 96], sizes = [4, 32], strides = [1, 1]} : vector<4x128xf32> to vector<4x32xf32>
    %312 = vector.extract_strided_slice %303 {offsets = [0, 64], sizes = [4, 32], strides = [1, 1]} : vector<4x128xf32> to vector<4x32xf32>
    %313 = math.tanh %312 : vector<4x32xf32>
    %314 = arith.mulf %310, %299 : vector<4x32xf32>
    %315 = arith.mulf %309, %313 : vector<4x32xf32>
    %316 = arith.addf %314, %315 : vector<4x32xf32>
    %317 = math.tanh %316 : vector<4x32xf32>
    %318 = arith.mulf %311, %317 : vector<4x32xf32>
    %c0_55 = arith.constant 0 : index
    %c0_56 = arith.constant 0 : index
    %319 = vector.load %arg7[%c0_55, %c0_56] : memref<32x1xf32, #tpu.memory_space<vmem>>, vector<32x1xf32>
    %cst_57 = arith.constant dense<0.000000e+00> : vector<4x1xf32>
    %320 = tpu.matmul %318, %319, %cst_57 {dimension_numbers = #tpu.dot_dimension_numbers<[1], [0], [0], [1], [0, 0, 1, 1], [], []>} : vector<4x32xf32>, vector<32x1xf32>, vector<4x1xf32> -> vector<4x1xf32>
    %c0_58 = arith.constant 0 : index
    %c0_59 = arith.constant 0 : index
    %321 = vector.load %arg8[%c0_58, %c0_59] : memref<1x1xf32, #tpu.memory_space<vmem>>, vector<1x1xf32>
    %322 = vector.broadcast %321 : vector<1x1xf32> to vector<4x1xf32>
    %323 = arith.addf %320, %322 : vector<4x1xf32>
    %c0_60 = arith.constant 0 : index
    %c0_61 = arith.constant 0 : index
    %324 = vector.load %arg9[%c0_60, %c0_61] : memref<4x1xf32, #tpu.memory_space<vmem>>, vector<4x1xf32>
    tpu.vector_store %arg9[%c0_60, %c0_61], %323 {strides = array<i32>} : memref<4x1xf32, #tpu.memory_space<vmem>>, vector<4x1xf32>,
    return
  }
}

</mosaic_0001>

<llo_original>
// kernel: forex_lstm_forward.1
$region0: #{forex_lstm_forward.1}
  #allocation0 [shape = 'u32[]', space=smem, size = 0x4, offset = 0x4, fixed_abs, tag = 'smem constant byte address 0x4 - core index']
  #allocation1 [shape = 'u32[144,128]{1,0:T(1,128)}', space=vmem, size = 0x12000, scoped, tag = 'internal scratch']
  #allocation2 [shape = 'f32[1,1]{1,0:T(1,128)S(1)}', space=vmem, size = 0x200, scoped, tag = 'scoped memory for forex_lstm_forward.1']
  %s0 = inlined_call_operand.vmem [shape: f32[8,4,8], index: 0, kind: input, shape index: {}]
  %s1 = inlined_call_operand.vmem [shape: f32[8,128], index: 1, kind: input, shape index: {}]
  %s2 = inlined_call_operand.vmem [shape: f32[32,128], index: 2, kind: input, shape index: {}]
  %s3 = inlined_call_operand.vmem [shape: f32[1,128], index: 3, kind: input, shape index: {}]
  %s4 = inlined_call_operand.vmem [shape: f32[32,128], index: 4, kind: input, shape index: {}]
  %s5 = inlined_call_operand.hbm [shape: f32[32,128], index: 5, kind: input, shape index: {}]
  %s6 = inlined_call_operand.vmem [shape: f32[1,128], index: 6, kind: input, shape index: {}]
  %s7 = inlined_call_operand.vmem [shape: f32[32,1], index: 7, kind: input, shape index: {}]
  %s8 = inlined_call_operand.<no memory space> [shape: f32[1,1], index: 8, kind: input, shape index: {}]
  %s9 = inlined_call_operand.vmem [shape: f32[4,1], index: 9, kind: output, shape index: {}]
  %s10 = sld [smem:[#allocation0]]
  $region50: #{forex_lstm_forward.1} parent=0
    _
  %s12 = ssub.s32 1, %s10
  %s13 = scalar_select 0, %s12, %s10
  %v14 = vstv %s8
  %15 = vst [vmem:[#allocation2] sm:$0x1] %v14
  $region1: #{forex_lstm_forward.1} parent=0
    #allocation3 [shape = 'u8[16384]{0}', space=vmem, size = 0x4000, scoped, tag = 'input window, operand 5, single buffered']
    #allocation4 [shape = 's32[1]{0}', space=sflag, size = 0x4, scoped, tag = 'scoped memory for forex_lstm_forward.1']
    %16 = vsyncpa [#allocation4], 0
    // Predicated region
    $region2: #{forex_lstm_forward.1} parent=1 // pred_check
      _
    $region3: #{forex_lstm_forward.1} parent=1 // pred_check_branch
      %18 = sbr.rel (0) target = $region5
    $region4: #{forex_lstm_forward.1} parent=1 // pred_region
      _
    $region5: #{forex_lstm_forward.1} parent=1 // pred_fallthru
      _
    // Predicated region
    $region6: #{forex_lstm_forward.1} parent=1 // pred_check
      _
    $region7: #{forex_lstm_forward.1} parent=1 // pred_check_branch
      %20 = sbr.rel (0) target = $region9
    $region8: #{forex_lstm_forward.1} parent=1 // pred_region
      _
    $region9: #{forex_lstm_forward.1} parent=1 // pred_fallthru
      _
    // Predicated region
    $region10: #{forex_lstm_forward.1} parent=1 // pred_check
      _
    $region11: #{forex_lstm_forward.1} parent=1 // pred_check_branch
      %22 = sbr.rel (0) target = $region13
    $region12: #{forex_lstm_forward.1} parent=1 // pred_region
      _
    $region13: #{forex_lstm_forward.1} parent=1 // pred_fallthru
      _
    // Predicated region
    $region14: #{forex_lstm_forward.1} parent=1 // pred_check
      _
    $region15: #{forex_lstm_forward.1} parent=1 // pred_check_branch
      %24 = sbr.rel (0) target = $region17
    $region16: #{forex_lstm_forward.1} parent=1 // pred_region
      _
    $region17: #{forex_lstm_forward.1} parent=1 // pred_fallthru
      _
    // Predicated region
    $region18: #{forex_lstm_forward.1} parent=1 // pred_check
      _
    $region19: #{forex_lstm_forward.1} parent=1 // pred_check_branch
      %26 = sbr.rel (0) target = $region21
    $region20: #{forex_lstm_forward.1} parent=1 // pred_region
      _
    $region21: #{forex_lstm_forward.1} parent=1 // pred_fallthru
      _
    // Predicated region
    $region22: #{forex_lstm_forward.1} parent=1 // pred_check
      _
    $region23: #{forex_lstm_forward.1} parent=1 // pred_check_branch
      %28 = sbr.rel (0) target = $region25
    $region24: #{forex_lstm_forward.1} parent=1 // pred_region
      %s30 = ssub.s32 512, 512
      %31 = vsyncadd [#allocation4], %s30
      %s32 = sshll.u32 [#allocation3], 4
      %s33 = int_to_ptr.vmem [resolvable:$true] %s32
      %38 = dma.hbm_to_vmem [thread:$0]  %s5, 512, %s33, [#allocation4], 128, 128, 8
    $region25: #{forex_lstm_forward.1} parent=1 // pred_fallthru
      _
    // Predicated region
    $region26: #{forex_lstm_forward.1} parent=1 // pred_check
      _
    $region27: #{forex_lstm_forward.1} parent=1 // pred_check_branch
      %40 = sbr.rel (0) target = $region29
    $region28: #{forex_lstm_forward.1} parent=1 // pred_region
      _
    $region29: #{forex_lstm_forward.1} parent=1 // pred_fallthru
      _
    // Predicated region
    $region30: #{forex_lstm_forward.1} parent=1 // pred_check
      _
    $region31: #{forex_lstm_forward.1} parent=1 // pred_check_branch
      %42 = sbr.rel (0) target = $region33
    $region32: #{forex_lstm_forward.1} parent=1 // pred_region
      _
    $region33: #{forex_lstm_forward.1} parent=1 // pred_fallthru
      _
    // Predicated region
    $region34: #{forex_lstm_forward.1} parent=1 // pred_check
      _
    $region35: #{forex_lstm_forward.1} parent=1 // pred_check_branch
      %44 = sbr.rel (0) target = $region37
    $region36: #{forex_lstm_forward.1} parent=1 // pred_region
      _
    $region37: #{forex_lstm_forward.1} parent=1 // pred_fallthru
      _
    // Predicated region
    $region38: #{forex_lstm_forward.1} parent=1 // pred_check
      _
    $region39: #{forex_lstm_forward.1} parent=1 // pred_check_branch
      %46 = sbr.rel (0) target = $region41
    $region40: #{forex_lstm_forward.1} parent=1 // pred_region
      %47 = dma.done [#allocation4], 512
    $region41: #{forex_lstm_forward.1} parent=1 // pred_fallthru
      _
    %v48 = vld [vmem:[%s1] sm:$0xff]
    %v49 = vld [vmem:[%s4] sm:$0xff]
    %v50 = vld [vmem:[%s4 + $0x8] sm:$0xff]
    %v51 = vld [vmem:[%s4 + $0x10] sm:$0xff]
    %v52 = vld [vmem:[%s4 + $0x18] sm:$0xff]
    %v53 = vld [vmem:[%s2] sm:$0xff]
    %v54 = vld [vmem:[%s2 + $0x8] sm:$0xff]
    %v55 = vld [vmem:[%s2 + $0x10] sm:$0xff]
    %v56 = vld [vmem:[%s2 + $0x18] sm:$0xff]
    %v57 = vld [vmem:[#allocation3] sm:$0xff]
    %v58 = vld [vmem:[#allocation3 + $0x8] sm:$0xff]
    %v59 = vld [vmem:[#allocation3 + $0x10] sm:$0xff]
    %v60 = vld [vmem:[#allocation3 + $0x18] sm:$0xff]
    %v61 = vld [vmem:[%s3] sm:$0x1]
    %v62 = vld [vmem:[%s6] sm:$0x1]
    %v64 = vlaneseq
    %v65 = vshrl.u32 %v64, 7
    %v66 = vsub.s32 0, %v65
    %v67 = vrot.slane %v62, %v66
    %v69 = vld [vmem:[%s0] sm:$0xf]
    %v70 = vld [vmem:[%s0 + $0x4] sm:$0xf]
    %v71 = vld [vmem:[%s0 + $0x8] sm:$0xf]
    %v72 = vld [vmem:[%s0 + $0xc] sm:$0xf]
    %v73 = vld [vmem:[%s0 + $0x10] sm:$0xf]
    %v74 = vld [vmem:[%s0 + $0x14] sm:$0xf]
    %v75 = vld [vmem:[%s0 + $0x18] sm:$0xf]
    %v76 = vld [vmem:[%s0 + $0x1c] sm:$0xf]
    %v78 = vlaneseq
    %v79 = vshrl.u32 %v78, 7
    %v80 = vsub.s32 0, %v79
    %v81 = vrot.slane %v61, %v80
    %v91 = vcombine.low %v69, %v70
    %v92 = vcombine.low %v71, %v72
    %v93 = vcombine.low %v73, %v74
    %v94 = vcombine.low %v75, %v76
    %vm95 = vcmask 64512
    %v96 = vsel %vm95, %v91, 0
    %v98 = vsel %vm95, %v92, 0
    %v100 = vsel %vm95, %v93, 0
    %v102 = vsel %vm95, %v94, 0
    %104 = vmatprep.subr.mxu0 0.0
    %105 = vmatpush1.msra.mxu0 0.0
    %106 = vmatprep.subr.mxu0 0.0
    %107 = vmatpush1.msra.mxu0 0.0
    %108 = vmatprep.subr.mxu0 0.0
    %109 = vmatpush1.msra.mxu0 0.0
    %110 = vmatprep.subr.mxu0 0.0
    %111 = vmatpush1.msra.mxu0 0.0
    %112 = vmatprep.subr.mxu0 0.0
    %113 = vmatpush1.msra.mxu0 0.0
    %114 = vmatprep.subr.mxu0 0.0
    %115 = vmatpush1.msra.mxu0 0.0
    %116 = vmatprep.subr.mxu0 0.0
    %117 = vmatpush1.msra.mxu0 0.0
    %118 = vmatprep.subr.mxu0 0.0
    %119 = vmatpush1.msra.mxu0 0.0
    %120 = vmatprep.subr.mxu0 0.0
    %121 = vmatpush1.msra.mxu0 0.0
    %122 = vmatprep.subr.mxu0 0.0
    %123 = vmatpush1.msra.mxu0 0.0
    %124 = vmatprep.subr.mxu0 0.0
    %125 = vmatpush1.msra.mxu0 0.0
    %126 = vmatprep.subr.mxu0 0.0
    %127 = vmatpush1.msra.mxu0 0.0
    %128 = vmatprep.subr.mxu0 0.0
    %129 = vmatpush1.msra.mxu0 0.0
    %130 = vmatprep.subr.mxu0 0.0
    %131 = vmatpush1.msra.mxu0 0.0
    %132 = vmatprep.subr.mxu0 0.0
    %133 = vmatpush1.msra.mxu0 0.0
    %134 = vmatprep.subr.mxu0 0.0
    %135 = vmatpush1.msra.mxu0 %v48
    %136 = vmatprep.subr.mxu0 0.0
    %137 = vmatpush2.msra.mxu0 0.0
    %138 = vmatprep.subr.mxu0 0.0
    %139 = vmatpush2.msra.mxu0 0.0
    %140 = vmatprep.subr.mxu0 0.0
    %141 = vmatpush2.msra.mxu0 0.0
    %142 = vmatprep.subr.mxu0 0.0
    %143 = vmatpush2.msra.mxu0 0.0
    %144 = vmatprep.subr.mxu0 0.0
    %145 = vmatpush2.msra.mxu0 0.0
    %146 = vmatprep.subr.mxu0 0.0
    %147 = vmatpush2.msra.mxu0 0.0
    %148 = vmatprep.subr.mxu0 0.0
    %149 = vmatpush2.msra.mxu0 0.0
    %150 = vmatprep.subr.mxu0 0.0
    %151 = vmatpush2.msra.mxu0 0.0
    %152 = vmatprep.subr.mxu0 0.0
    %153 = vmatpush2.msra.mxu0 0.0
    %154 = vmatprep.subr.mxu0 0.0
    %155 = vmatpush2.msra.mxu0 0.0
    %156 = vmatprep.subr.mxu0 0.0
    %157 = vmatpush2.msra.mxu0 0.0
    %158 = vmatprep.subr.mxu0 0.0
    %159 = vmatpush2.msra.mxu0 0.0
    %160 = vmatprep.subr.mxu0 0.0
    %161 = vmatpush2.msra.mxu0 0.0
    %162 = vmatprep.subr.mxu0 0.0
    %163 = vmatpush2.msra.mxu0 0.0
    %164 = vmatprep.subr.mxu0 0.0
    %165 = vmatpush2.msra.mxu0 0.0
    %166 = vmatprep.subr.mxu0 0.0
    %167 = vmatpush2.msra.mxu0 0.0
    %168 = vmatprep.mubr.f32.mxu0 0.0
    %169 = vmatmul.mubr.f32.gmra.mxu0 %v96
    %v170 = vpop.f32.mrf.mxu0
    %v171 = vadd.f32 %v81, %v170
    %v172 = vpop.f32.mrf.mxu0
    %173 = vmatprep.mubr.f32.mxu0 0.0
    %174 = vmatmul.mubr.f32.gmra.mxu0 %v98
    %v175 = vpop.f32.mrf.mxu0
    %v176 = vadd.f32 %v81, %v175
    %v177 = vpop.f32.mrf.mxu0
    %178 = vmatprep.mubr.f32.mxu0 0.0
    %179 = vmatmul.mubr.f32.gmra.mxu0 %v100
    %v180 = vpop.f32.mrf.mxu0
    %v181 = vadd.f32 %v81, %v180
    %v182 = vpop.f32.mrf.mxu0
    %183 = vmatprep.mubr.f32.mxu0 0.0
    %184 = vmatmul.mubr.f32.gmra.mxu0 %v102
    %v185 = vpop.f32.mrf.mxu0
    %v186 = vadd.f32 %v81, %v185
    %v187 = vpop.f32.mrf.mxu0
    %188 = vdwg.mxu0
    %v193 = vcombine.high %v171, %v171
    %v194 = vcombine.high %v176, %v176
    %v195 = vcombine.high %v181, %v181
    %v196 = vcombine.high %v186, %v186
    %vm201 = vcmask 261120
    %v203 = vsel %vm201, 0.0, 0
    %205 = vmatprep.subr.mxu0 0.0
    %206 = vmatpush1.msra.mxu0 0.0
    %207 = vmatprep.subr.mxu0 0.0
    %208 = vmatpush1.msra.mxu0 0.0
    %209 = vmatprep.subr.mxu0 0.0
    %210 = vmatpush1.msra.mxu0 0.0
    %211 = vmatprep.subr.mxu0 0.0
    %212 = vmatpush1.msra.mxu0 0.0
    %213 = vmatprep.subr.mxu0 0.0
    %214 = vmatpush1.msra.mxu0 0.0
    %215 = vmatprep.subr.mxu0 0.0
    %216 = vmatpush1.msra.mxu0 0.0
    %217 = vmatprep.subr.mxu0 0.0
    %218 = vmatpush1.msra.mxu0 0.0
    %219 = vmatprep.subr.mxu0 0.0
    %220 = vmatpush1.msra.mxu0 0.0
    %221 = vmatprep.subr.mxu0 0.0
    %222 = vmatpush1.msra.mxu0 0.0
    %223 = vmatprep.subr.mxu0 0.0
    %224 = vmatpush1.msra.mxu0 0.0
    %225 = vmatprep.subr.mxu0 0.0
    %226 = vmatpush1.msra.mxu0 0.0
    %227 = vmatprep.subr.mxu0 0.0
    %228 = vmatpush1.msra.mxu0 0.0
    %229 = vmatprep.subr.mxu0 0.0
    %230 = vmatpush1.msra.mxu0 %v56
    %231 = vmatprep.subr.mxu0 0.0
    %232 = vmatpush1.msra.mxu0 %v55
    %233 = vmatprep.subr.mxu0 0.0
    %234 = vmatpush1.msra.mxu0 %v54
    %235 = vmatprep.subr.mxu0 0.0
    %236 = vmatpush1.msra.mxu0 %v53
    %237 = vmatprep.subr.mxu0 0.0
    %238 = vmatpush2.msra.mxu0 0.0
    %239 = vmatprep.subr.mxu0 0.0
    %240 = vmatpush2.msra.mxu0 0.0
    %241 = vmatprep.subr.mxu0 0.0
    %242 = vmatpush2.msra.mxu0 0.0
    %243 = vmatprep.subr.mxu0 0.0
    %244 = vmatpush2.msra.mxu0 0.0
    %245 = vmatprep.subr.mxu0 0.0
    %246 = vmatpush2.msra.mxu0 0.0
    %247 = vmatprep.subr.mxu0 0.0
    %248 = vmatpush2.msra.mxu0 0.0
    %249 = vmatprep.subr.mxu0 0.0
    %250 = vmatpush2.msra.mxu0 0.0
    %251 = vmatprep.subr.mxu0 0.0
    %252 = vmatpush2.msra.mxu0 0.0
    %253 = vmatprep.subr.mxu0 0.0
    %254 = vmatpush2.msra.mxu0 0.0
    %255 = vmatprep.subr.mxu0 0.0
    %256 = vmatpush2.msra.mxu0 0.0
    %257 = vmatprep.subr.mxu0 0.0
    %258 = vmatpush2.msra.mxu0 0.0
    %259 = vmatprep.subr.mxu0 0.0
    %260 = vmatpush2.msra.mxu0 0.0
    %261 = vmatprep.subr.mxu0 0.0
    %262 = vmatpush2.msra.mxu0 0.0
    %263 = vmatprep.subr.mxu0 0.0
    %264 = vmatpush2.msra.mxu0 0.0
    %265 = vmatprep.subr.mxu0 0.0
    %266 = vmatpush2.msra.mxu0 0.0
    %267 = vmatprep.subr.mxu0 0.0
    %268 = vmatpush2.msra.mxu0 0.0
    %269 = vmatprep.mubr.f32.mxu0 0.0
    %270 = vmatmul.mubr.f32.gmra.mxu0 %v203
    %v271 = vpop.f32.mrf.mxu0
    %v272 = vadd.f32 0.0, %v271
    %v273 = vpop.f32.mrf.mxu0
    %274 = vdwg.mxu0
    %v275 = vadd.f32 %v171, %v272
    %v276 = vxor.u32 %v275, 2147483648
    %v277 = vmul.f32 %v276, 1.442695
    %v278 = vpow.pop %v277
    %v279 = vadd.f32 %v278, 1.0
    %v280 = vrcp.pop %v279
    %v281 = vmul.f32 1.0, %v280
    %v282 = vtanh.pop %v275
    %v283 = vmul.f32 %v281, 0.0
    %285 = vrot.lane.b32.xlu0 %v282, 64
    %v286 = vpop.permute.xlu0 %285
    %v288 = vmul.f32 %v281, %v286
    %290 = vrot.lane.b32.xlu0 %v288, 32
    %v291 = vpop.permute.xlu0 %290
    %v293 = vadd.f32 %v283, %v291
    %v294 = vtanh.pop %v293
    %296 = vrot.lane.b32.xlu0 %v294, 64
    %v297 = vpop.permute.xlu0 %296
    %v299 = vmul.f32 %v281, %v297
    %301 = vrot.lane.b32.xlu0 %v299, 32
    %v302 = vpop.permute.xlu0 %301
    %v303 = vsel %vm201, %v302, 0
    %305 = vmatprep.subr.mxu0 0.0
    %306 = vmatpush1.msra.mxu0 0.0
    %307 = vmatprep.subr.mxu0 0.0
    %308 = vmatpush1.msra.mxu0 0.0
    %309 = vmatprep.subr.mxu0 0.0
    %310 = vmatpush1.msra.mxu0 0.0
    %311 = vmatprep.subr.mxu0 0.0
    %312 = vmatpush1.msra.mxu0 0.0
    %313 = vmatprep.subr.mxu0 0.0
    %314 = vmatpush1.msra.mxu0 0.0
    %315 = vmatprep.subr.mxu0 0.0
    %316 = vmatpush1.msra.mxu0 0.0
    %317 = vmatprep.subr.mxu0 0.0
    %318 = vmatpush1.msra.mxu0 0.0
    %319 = vmatprep.subr.mxu0 0.0
    %320 = vmatpush1.msra.mxu0 0.0
    %321 = vmatprep.subr.mxu0 0.0
    %322 = vmatpush1.msra.mxu0 0.0
    %323 = vmatprep.subr.mxu0 0.0
    %324 = vmatpush1.msra.mxu0 0.0
    %325 = vmatprep.subr.mxu0 0.0
    %326 = vmatpush1.msra.mxu0 0.0
    %327 = vmatprep.subr.mxu0 0.0
    %328 = vmatpush1.msra.mxu0 0.0
    %329 = vmatprep.subr.mxu0 0.0
    %330 = vmatpush1.msra.mxu0 %v52
    %331 = vmatprep.subr.mxu0 0.0
    %332 = vmatpush1.msra.mxu0 %v51
    %333 = vmatprep.subr.mxu0 0.0
    %334 = vmatpush1.msra.mxu0 %v50
    %335 = vmatprep.subr.mxu0 0.0
    %336 = vmatpush1.msra.mxu0 %v49
    %337 = vmatprep.subr.mxu0 0.0
    %338 = vmatpush2.msra.mxu0 0.0
    %339 = vmatprep.subr.mxu0 0.0
    %340 = vmatpush2.msra.mxu0 0.0
    %341 = vmatprep.subr.mxu0 0.0
    %342 = vmatpush2.msra.mxu0 0.0
    %343 = vmatprep.subr.mxu0 0.0
    %344 = vmatpush2.msra.mxu0 0.0
    %345 = vmatprep.subr.mxu0 0.0
    %346 = vmatpush2.msra.mxu0 0.0
    %347 = vmatprep.subr.mxu0 0.0
    %348 = vmatpush2.msra.mxu0 0.0
    %349 = vmatprep.subr.mxu0 0.0
    %350 = vmatpush2.msra.mxu0 0.0
    %351 = vmatprep.subr.mxu0 0.0
    %352 = vmatpush2.msra.mxu0 0.0
    %353 = vmatprep.subr.mxu0 0.0
    %354 = vmatpush2.msra.mxu0 0.0
    %355 = vmatprep.subr.mxu0 0.0
    %356 = vmatpush2.msra.mxu0 0.0
    %357 = vmatprep.subr.mxu0 0.0
    %358 = vmatpush2.msra.mxu0 0.0
    %359 = vmatprep.subr.mxu0 0.0
    %360 = vmatpush2.msra.mxu0 0.0
    %361 = vmatprep.subr.mxu0 0.0
    %362 = vmatpush2.msra.mxu0 0.0
    %363 = vmatprep.subr.mxu0 0.0
    %364 = vmatpush2.msra.mxu0 0.0
    %365 = vmatprep.subr.mxu0 0.0
    %366 = vmatpush2.msra.mxu0 0.0
    %367 = vmatprep.subr.mxu0 0.0
    %368 = vmatpush2.msra.mxu0 0.0
    %369 = vmatprep.mubr.f32.mxu0 0.0
    %370 = vmatmul.mubr.f32.gmra.mxu0 %v303
    %v371 = vpop.f32.mrf.mxu0
    %v372 = vadd.f32 %v67, %v371
    %v373 = vpop.f32.mrf.mxu0
    %374 = vdwg.mxu0
    %375 = vmatprep.subr.mxu0 0.0
    %376 = vmatpush1.msra.mxu0 0.0
    %377 = vmatprep.subr.mxu0 0.0
    %378 = vmatpush1.msra.mxu0 0.0
    %379 = vmatprep.subr.mxu0 0.0
    %380 = vmatpush1.msra.mxu0 0.0
    %381 = vmatprep.subr.mxu0 0.0
    %382 = vmatpush1.msra.mxu0 0.0
    %383 = vmatprep.subr.mxu0 0.0
    %384 = vmatpush1.msra.mxu0 0.0
    %385 = vmatprep.subr.mxu0 0.0
    %386 = vmatpush1.msra.mxu0 0.0
    %387 = vmatprep.subr.mxu0 0.0
    %388 = vmatpush1.msra.mxu0 0.0
    %389 = vmatprep.subr.mxu0 0.0
    %390 = vmatpush1.msra.mxu0 0.0
    %391 = vmatprep.subr.mxu0 0.0
    %392 = vmatpush1.msra.mxu0 0.0
    %393 = vmatprep.subr.mxu0 0.0
    %394 = vmatpush1.msra.mxu0 0.0
    %395 = vmatprep.subr.mxu0 0.0
    %396 = vmatpush1.msra.mxu0 0.0
    %397 = vmatprep.subr.mxu0 0.0
    %398 = vmatpush1.msra.mxu0 0.0
    %399 = vmatprep.subr.mxu0 0.0
    %400 = vmatpush1.msra.mxu0 %v56
    %401 = vmatprep.subr.mxu0 0.0
    %402 = vmatpush1.msra.mxu0 %v55
    %403 = vmatprep.subr.mxu0 0.0
    %404 = vmatpush1.msra.mxu0 %v54
    %405 = vmatprep.subr.mxu0 0.0
    %406 = vmatpush1.msra.mxu0 %v53
    %407 = vmatprep.subr.mxu0 0.0
    %408 = vmatpush2.msra.mxu0 0.0
    %409 = vmatprep.subr.mxu0 0.0
    %410 = vmatpush2.msra.mxu0 0.0
    %411 = vmatprep.subr.mxu0 0.0
    %412 = vmatpush2.msra.mxu0 0.0
    %413 = vmatprep.subr.mxu0 0.0
    %414 = vmatpush2.msra.mxu0 0.0
    %415 = vmatprep.subr.mxu0 0.0
    %416 = vmatpush2.msra.mxu0 0.0
    %417 = vmatprep.subr.mxu0 0.0
    %418 = vmatpush2.msra.mxu0 0.0
    %419 = vmatprep.subr.mxu0 0.0
    %420 = vmatpush2.msra.mxu0 0.0
    %421 = vmatprep.subr.mxu0 0.0
    %422 = vmatpush2.msra.mxu0 0.0
    %423 = vmatprep.subr.mxu0 0.0
    %424 = vmatpush2.msra.mxu0 0.0
    %425 = vmatprep.subr.mxu0 0.0
    %426 = vmatpush2.msra.mxu0 0.0
    %427 = vmatprep.subr.mxu0 0.0
    %428 = vmatpush2.msra.mxu0 0.0
    %429 = vmatprep.subr.mxu0 0.0
    %430 = vmatpush2.msra.mxu0 0.0
    %431 = vmatprep.subr.mxu0 0.0
    %432 = vmatpush2.msra.mxu0 0.0
    %433 = vmatprep.subr.mxu0 0.0
    %434 = vmatpush2.msra.mxu0 0.0
    %435 = vmatprep.subr.mxu0 0.0
    %436 = vmatpush2.msra.mxu0 0.0
    %437 = vmatprep.subr.mxu0 0.0
    %438 = vmatpush2.msra.mxu0 0.0
    %439 = vmatprep.mubr.f32.mxu0 0.0
    %440 = vmatmul.mubr.f32.gmra.mxu0 %v303
    %v441 = vpop.f32.mrf.mxu0
    %v442 = vadd.f32 0.0, %v441
    %v443 = vpop.f32.mrf.mxu0
    %444 = vdwg.mxu0
    %v445 = vadd.f32 %v193, %v442
    %v446 = vxor.u32 %v445, 2147483648
    %v447 = vmul.f32 %v446, 1.442695
    %v448 = vpow.pop %v447
    %v449 = vadd.f32 %v448, 1.0
    %v450 = vrcp.pop %v449
    %v451 = vmul.f32 1.0, %v450
    %v452 = vtanh.pop %v445
    %v453 = vmul.f32 %v451, %v293
    %455 = vrot.lane.b32.xlu0 %v452, 64
    %v456 = vpop.permute.xlu0 %455
    %v458 = vmul.f32 %v451, %v456
    %460 = vrot.lane.b32.xlu0 %v458, 32
    %v461 = vpop.permute.xlu0 %460
    %v463 = vadd.f32 %v453, %v461
    %v464 = vtanh.pop %v463
    %466 = vrot.lane.b32.xlu0 %v464, 64
    %v467 = vpop.permute.xlu0 %466
    %v469 = vmul.f32 %v451, %v467
    %471 = vrot.lane.b32.xlu0 %v469, 32
    %v472 = vpop.permute.xlu0 %471
    %v473 = vsel %vm201, %v472, 0
    %475 = vmatprep.subr.mxu0 0.0
    %476 = vmatpush1.msra.mxu0 0.0
    %477 = vmatprep.subr.mxu0 0.0
    %478 = vmatpush1.msra.mxu0 0.0
    %479 = vmatprep.subr.mxu0 0.0
    %480 = vmatpush1.msra.mxu0 0.0
    %481 = vmatprep.subr.mxu0 0.0
    %482 = vmatpush1.msra.mxu0 0.0
    %483 = vmatprep.subr.mxu0 0.0
    %484 = vmatpush1.msra.mxu0 0.0
    %485 = vmatprep.subr.mxu0 0.0
    %486 = vmatpush1.msra.mxu0 0.0
    %487 = vmatprep.subr.mxu0 0.0
    %488 = vmatpush1.msra.mxu0 0.0
    %489 = vmatprep.subr.mxu0 0.0
    %490 = vmatpush1.msra.mxu0 0.0
    %491 = vmatprep.subr.mxu0 0.0
    %492 = vmatpush1.msra.mxu0 0.0
    %493 = vmatprep.subr.mxu0 0.0
    %494 = vmatpush1.msra.mxu0 0.0
    %495 = vmatprep.subr.mxu0 0.0
    %496 = vmatpush1.msra.mxu0 0.0
    %497 = vmatprep.subr.mxu0 0.0
    %498 = vmatpush1.msra.mxu0 0.0
    %499 = vmatprep.subr.mxu0 0.0
    %500 = vmatpush1.msra.mxu0 %v52
    %501 = vmatprep.subr.mxu0 0.0
    %502 = vmatpush1.msra.mxu0 %v51
    %503 = vmatprep.subr.mxu0 0.0
    %504 = vmatpush1.msra.mxu0 %v50
    %505 = vmatprep.subr.mxu0 0.0
    %506 = vmatpush1.msra.mxu0 %v49
    %507 = vmatprep.subr.mxu0 0.0
    %508 = vmatpush2.msra.mxu0 0.0
    %509 = vmatprep.subr.mxu0 0.0
    %510 = vmatpush2.msra.mxu0 0.0
    %511 = vmatprep.subr.mxu0 0.0
    %512 = vmatpush2.msra.mxu0 0.0
    %513 = vmatprep.subr.mxu0 0.0
    %514 = vmatpush2.msra.mxu0 0.0
    %515 = vmatprep.subr.mxu0 0.0
    %516 = vmatpush2.msra.mxu0 0.0
    %517 = vmatprep.subr.mxu0 0.0
    %518 = vmatpush2.msra.mxu0 0.0
    %519 = vmatprep.subr.mxu0 0.0
    %520 = vmatpush2.msra.mxu0 0.0
    %521 = vmatprep.subr.mxu0 0.0
    %522 = vmatpush2.msra.mxu0 0.0
    %523 = vmatprep.subr.mxu0 0.0
    %524 = vmatpush2.msra.mxu0 0.0
    %525 = vmatprep.subr.mxu0 0.0
    %526 = vmatpush2.msra.mxu0 0.0
    %527 = vmatprep.subr.mxu0 0.0
    %528 = vmatpush2.msra.mxu0 0.0
    %529 = vmatprep.subr.mxu0 0.0
    %530 = vmatpush2.msra.mxu0 0.0
    %531 = vmatprep.subr.mxu0 0.0
    %532 = vmatpush2.msra.mxu0 0.0
    %533 = vmatprep.subr.mxu0 0.0
    %534 = vmatpush2.msra.mxu0 0.0
    %535 = vmatprep.subr.mxu0 0.0
    %536 = vmatpush2.msra.mxu0 0.0
    %537 = vmatprep.subr.mxu0 0.0
    %538 = vmatpush2.msra.mxu0 0.0
    %539 = vmatprep.mubr.f32.mxu0 0.0
    %540 = vmatmul.mubr.f32.gmra.mxu0 %v473
    %v541 = vpop.f32.mrf.mxu0
    %v542 = vadd.f32 %v67, %v541
    %v543 = vpop.f32.mrf.mxu0
    %544 = vdwg.mxu0
    %545 = vmatprep.subr.mxu0 0.0
    %546 = vmatpush1.msra.mxu0 0.0
    %547 = vmatprep.subr.mxu0 0.0
    %548 = vmatpush1.msra.mxu0 0.0
    %549 = vmatprep.subr.mxu0 0.0
    %550 = vmatpush1.msra.mxu0 0.0
    %551 = vmatprep.subr.mxu0 0.0
    %552 = vmatpush1.msra.mxu0 0.0
    %553 = vmatprep.subr.mxu0 0.0
    %554 = vmatpush1.msra.mxu0 0.0
    %555 = vmatprep.subr.mxu0 0.0
    %556 = vmatpush1.msra.mxu0 0.0
    %557 = vmatprep.subr.mxu0 0.0
    %558 = vmatpush1.msra.mxu0 0.0
    %559 = vmatprep.subr.mxu0 0.0
    %560 = vmatpush1.msra.mxu0 0.0
    %561 = vmatprep.subr.mxu0 0.0
    %562 = vmatpush1.msra.mxu0 0.0
    %563 = vmatprep.subr.mxu0 0.0
    %564 = vmatpush1.msra.mxu0 0.0
    %565 = vmatprep.subr.mxu0 0.0
    %566 = vmatpush1.msra.mxu0 0.0
    %567 = vmatprep.subr.mxu0 0.0
    %568 = vmatpush1.msra.mxu0 0.0
    %569 = vmatprep.subr.mxu0 0.0
    %570 = vmatpush1.msra.mxu0 %v60
    %571 = vmatprep.subr.mxu0 0.0
    %572 = vmatpush1.msra.mxu0 %v59
    %573 = vmatprep.subr.mxu0 0.0
    %574 = vmatpush1.msra.mxu0 %v58
    %575 = vmatprep.subr.mxu0 0.0
    %576 = vmatpush1.msra.mxu0 %v57
    %577 = vmatprep.subr.mxu0 0.0
    %578 = vmatpush2.msra.mxu0 0.0
    %579 = vmatprep.subr.mxu0 0.0
    %580 = vmatpush2.msra.mxu0 0.0
    %581 = vmatprep.subr.mxu0 0.0
    %582 = vmatpush2.msra.mxu0 0.0
    %583 = vmatprep.subr.mxu0 0.0
    %584 = vmatpush2.msra.mxu0 0.0
    %585 = vmatprep.subr.mxu0 0.0
    %586 = vmatpush2.msra.mxu0 0.0
    %587 = vmatprep.subr.mxu0 0.0
    %588 = vmatpush2.msra.mxu0 0.0
    %589 = vmatprep.subr.mxu0 0.0
    %590 = vmatpush2.msra.mxu0 0.0
    %591 = vmatprep.subr.mxu0 0.0
    %592 = vmatpush2.msra.mxu0 0.0
    %593 = vmatprep.subr.mxu0 0.0
    %594 = vmatpush2.msra.mxu0 0.0
    %595 = vmatprep.subr.mxu0 0.0
    %596 = vmatpush2.msra.mxu0 0.0
    %597 = vmatprep.subr.mxu0 0.0
    %598 = vmatpush2.msra.mxu0 0.0
    %599 = vmatprep.subr.mxu0 0.0
    %600 = vmatpush2.msra.mxu0 0.0
    %601 = vmatprep.subr.mxu0 0.0
    %602 = vmatpush2.msra.mxu0 0.0
    %603 = vmatprep.subr.mxu0 0.0
    %604 = vmatpush2.msra.mxu0 0.0
    %605 = vmatprep.subr.mxu0 0.0
    %606 = vmatpush2.msra.mxu0 0.0
    %607 = vmatprep.subr.mxu0 0.0
    %608 = vmatpush2.msra.mxu0 0.0
    %609 = vmatprep.mubr.f32.mxu0 0.0
    %610 = vmatmul.mubr.f32.gmra.mxu0 %v203
    %v611 = vpop.f32.mrf.mxu0
    %v612 = vadd.f32 0.0, %v611
    %v613 = vpop.f32.mrf.mxu0
    %614 = vdwg.mxu0
    %v615 = vadd.f32 %v372, %v612
    %v616 = vxor.u32 %v615, 2147483648
    %v617 = vmul.f32 %v616, 1.442695
    %v618 = vpow.pop %v617
    %v619 = vadd.f32 %v618, 1.0
    %v620 = vrcp.pop %v619
    %v621 = vmul.f32 1.0, %v620
    %v622 = vtanh.pop %v615
    %v623 = vmul.f32 %v621, 0.0
    %625 = vrot.lane.b32.xlu0 %v622, 64
    %v626 = vpop.permute.xlu0 %625
    %v628 = vmul.f32 %v621, %v626
    %630 = vrot.lane.b32.xlu0 %v628, 32
    %v631 = vpop.permute.xlu0 %630
    %v633 = vadd.f32 %v623, %v631
    %v634 = vtanh.pop %v633
    %636 = vrot.lane.b32.xlu0 %v634, 64
    %v637 = vpop.permute.xlu0 %636
    %v639 = vmul.f32 %v621, %v637
    %640 = vmatprep.subr.mxu0 0.0
    %641 = vmatpush1.msra.mxu0 0.0
    %642 = vmatprep.subr.mxu0 0.0
    %643 = vmatpush1.msra.mxu0 0.0
    %644 = vmatprep.subr.mxu0 0.0
    %645 = vmatpush1.msra.mxu0 0.0
    %646 = vmatprep.subr.mxu0 0.0
    %647 = vmatpush1.msra.mxu0 0.0
    %648 = vmatprep.subr.mxu0 0.0
    %649 = vmatpush1.msra.mxu0 0.0
    %650 = vmatprep.subr.mxu0 0.0
    %651 = vmatpush1.msra.mxu0 0.0
    %652 = vmatprep.subr.mxu0 0.0
    %653 = vmatpush1.msra.mxu0 0.0
    %654 = vmatprep.subr.mxu0 0.0
    %655 = vmatpush1.msra.mxu0 0.0
    %656 = vmatprep.subr.mxu0 0.0
    %657 = vmatpush1.msra.mxu0 0.0
    %658 = vmatprep.subr.mxu0 0.0
    %659 = vmatpush1.msra.mxu0 0.0
    %660 = vmatprep.subr.mxu0 0.0
    %661 = vmatpush1.msra.mxu0 0.0
    %662 = vmatprep.subr.mxu0 0.0
    %663 = vmatpush1.msra.mxu0 0.0
    %664 = vmatprep.subr.mxu0 0.0
    %665 = vmatpush1.msra.mxu0 %v56
    %666 = vmatprep.subr.mxu0 0.0
    %667 = vmatpush1.msra.mxu0 %v55
    %668 = vmatprep.subr.mxu0 0.0
    %669 = vmatpush1.msra.mxu0 %v54
    %670 = vmatprep.subr.mxu0 0.0
    %671 = vmatpush1.msra.mxu0 %v53
    %672 = vmatprep.subr.mxu0 0.0
    %673 = vmatpush2.msra.mxu0 0.0
    %674 = vmatprep.subr.mxu0 0.0
    %675 = vmatpush2.msra.mxu0 0.0
    %676 = vmatprep.subr.mxu0 0.0
    %677 = vmatpush2.msra.mxu0 0.0
    %678 = vmatprep.subr.mxu0 0.0
    %679 = vmatpush2.msra.mxu0 0.0
    %680 = vmatprep.subr.mxu0 0.0
    %681 = vmatpush2.msra.mxu0 0.0
    %682 = vmatprep.subr.mxu0 0.0
    %683 = vmatpush2.msra.mxu0 0.0
    %684 = vmatprep.subr.mxu0 0.0
    %685 = vmatpush2.msra.mxu0 0.0
    %686 = vmatprep.subr.mxu0 0.0
    %687 = vmatpush2.msra.mxu0 0.0
    %688 = vmatprep.subr.mxu0 0.0
    %689 = vmatpush2.msra.mxu0 0.0
    %690 = vmatprep.subr.mxu0 0.0
    %691 = vmatpush2.msra.mxu0 0.0
    %692 = vmatprep.subr.mxu0 0.0
    %693 = vmatpush2.msra.mxu0 0.0
    %694 = vmatprep.subr.mxu0 0.0
    %695 = vmatpush2.msra.mxu0 0.0
    %696 = vmatprep.subr.mxu0 0.0
    %697 = vmatpush2.msra.mxu0 0.0
    %698 = vmatprep.subr.mxu0 0.0
    %699 = vmatpush2.msra.mxu0 0.0
    %700 = vmatprep.subr.mxu0 0.0
    %701 = vmatpush2.msra.mxu0 0.0
    %702 = vmatprep.subr.mxu0 0.0
    %703 = vmatpush2.msra.mxu0 0.0
    %704 = vmatprep.mubr.f32.mxu0 0.0
    %705 = vmatmul.mubr.f32.gmra.mxu0 %v473
    %v706 = vpop.f32.mrf.mxu0
    %v707 = vadd.f32 0.0, %v706
    %v708 = vpop.f32.mrf.mxu0
    %709 = vdwg.mxu0
    %v710 = vadd.f32 %v176, %v707
    %v711 = vxor.u32 %v710, 2147483648
    %v712 = vmul.f32 %v711, 1.442695
    %v713 = vpow.pop %v712
    %v714 = vadd.f32 %v713, 1.0
    %v715 = vrcp.pop %v714
    %v716 = vmul.f32 1.0, %v715
    %v717 = vtanh.pop %v710
    %v718 = vmul.f32 %v716, %v463
    %720 = vrot.lane.b32.xlu0 %v717, 64
    %v721 = vpop.permute.xlu0 %720
    %v723 = vmul.f32 %v716, %v721
    %725 = vrot.lane.b32.xlu0 %v723, 32
    %v726 = vpop.permute.xlu0 %725
    %v728 = vadd.f32 %v718, %v726
    %v729 = vtanh.pop %v728
    %731 = vrot.lane.b32.xlu0 %v729, 64
    %v732 = vpop.permute.xlu0 %731
    %v734 = vmul.f32 %v716, %v732
    %736 = vrot.lane.b32.xlu0 %v734, 32
    %v737 = vpop.permute.xlu0 %736
    %v738 = vsel %vm201, %v737, 0
    %740 = vmatprep.subr.mxu0 0.0
    %741 = vmatpush1.msra.mxu0 0.0
    %742 = vmatprep.subr.mxu0 0.0
    %743 = vmatpush1.msra.mxu0 0.0
    %744 = vmatprep.subr.mxu0 0.0
    %745 = vmatpush1.msra.mxu0 0.0
    %746 = vmatprep.subr.mxu0 0.0
    %747 = vmatpush1.msra.mxu0 0.0
    %748 = vmatprep.subr.mxu0 0.0
    %749 = vmatpush1.msra.mxu0 0.0
    %750 = vmatprep.subr.mxu0 0.0
    %751 = vmatpush1.msra.mxu0 0.0
    %752 = vmatprep.subr.mxu0 0.0
    %753 = vmatpush1.msra.mxu0 0.0
    %754 = vmatprep.subr.mxu0 0.0
    %755 = vmatpush1.msra.mxu0 0.0
    %756 = vmatprep.subr.mxu0 0.0
    %757 = vmatpush1.msra.mxu0 0.0
    %758 = vmatprep.subr.mxu0 0.0
    %759 = vmatpush1.msra.mxu0 0.0
    %760 = vmatprep.subr.mxu0 0.0
    %761 = vmatpush1.msra.mxu0 0.0
    %762 = vmatprep.subr.mxu0 0.0
    %763 = vmatpush1.msra.mxu0 0.0
    %764 = vmatprep.subr.mxu0 0.0
    %765 = vmatpush1.msra.mxu0 %v52
    %766 = vmatprep.subr.mxu0 0.0
    %767 = vmatpush1.msra.mxu0 %v51
    %768 = vmatprep.subr.mxu0 0.0
    %769 = vmatpush1.msra.mxu0 %v50
    %770 = vmatprep.subr.mxu0 0.0
    %771 = vmatpush1.msra.mxu0 %v49
    %772 = vmatprep.subr.mxu0 0.0
    %773 = vmatpush2.msra.mxu0 0.0
    %774 = vmatprep.subr.mxu0 0.0
    %775 = vmatpush2.msra.mxu0 0.0
    %776 = vmatprep.subr.mxu0 0.0
    %777 = vmatpush2.msra.mxu0 0.0
    %778 = vmatprep.subr.mxu0 0.0
    %779 = vmatpush2.msra.mxu0 0.0
    %780 = vmatprep.subr.mxu0 0.0
    %781 = vmatpush2.msra.mxu0 0.0
    %782 = vmatprep.subr.mxu0 0.0
    %783 = vmatpush2.msra.mxu0 0.0
    %784 = vmatprep.subr.mxu0 0.0
    %785 = vmatpush2.msra.mxu0 0.0
    %786 = vmatprep.subr.mxu0 0.0
    %787 = vmatpush2.msra.mxu0 0.0
    %788 = vmatprep.subr.mxu0 0.0
    %789 = vmatpush2.msra.mxu0 0.0
    %790 = vmatprep.subr.mxu0 0.0
    %791 = vmatpush2.msra.mxu0 0.0
    %792 = vmatprep.subr.mxu0 0.0
    %793 = vmatpush2.msra.mxu0 0.0
    %794 = vmatprep.subr.mxu0 0.0
    %795 = vmatpush2.msra.mxu0 0.0
    %796 = vmatprep.subr.mxu0 0.0
    %797 = vmatpush2.msra.mxu0 0.0
    %798 = vmatprep.subr.mxu0 0.0
    %799 = vmatpush2.msra.mxu0 0.0
    %800 = vmatprep.subr.mxu0 0.0
    %801 = vmatpush2.msra.mxu0 0.0
    %802 = vmatprep.subr.mxu0 0.0
    %803 = vmatpush2.msra.mxu0 0.0
    %804 = vmatprep.mubr.f32.mxu0 0.0
    %805 = vmatmul.mubr.f32.gmra.mxu0 %v738
    %v806 = vpop.f32.mrf.mxu0
    %v807 = vadd.f32 %v67, %v806
    %v808 = vpop.f32.mrf.mxu0
    %809 = vdwg.mxu0
    %811 = vrot.lane.b32.xlu0 %v639, 32
    %v812 = vpop.permute.xlu0 %811
    %v813 = vsel %vm201, %v812, 0
    %815 = vmatprep.subr.mxu0 0.0
    %816 = vmatpush1.msra.mxu0 0.0
    %817 = vmatprep.subr.mxu0 0.0
    %818 = vmatpush1.msra.mxu0 0.0
    %819 = vmatprep.subr.mxu0 0.0
    %820 = vmatpush1.msra.mxu0 0.0
    %821 = vmatprep.subr.mxu0 0.0
    %822 = vmatpush1.msra.mxu0 0.0
    %823 = vmatprep.subr.mxu0 0.0
    %824 = vmatpush1.msra.mxu0 0.0
    %825 = vmatprep.subr.mxu0 0.0
    %826 = vmatpush1.msra.mxu0 0.0
    %827 = vmatprep.subr.mxu0 0.0
    %828 = vmatpush1.msra.mxu0 0.0
    %829 = vmatprep.subr.mxu0 0.0
    %830 = vmatpush1.msra.mxu0 0.0
    %831 = vmatprep.subr.mxu0 0.0
    %832 = vmatpush1.msra.mxu0 0.0
    %833 = vmatprep.subr.mxu0 0.0
    %834 = vmatpush1.msra.mxu0 0.0
    %835 = vmatprep.subr.mxu0 0.0
    %836 = vmatpush1.msra.mxu0 0.0
    %837 = vmatprep.subr.mxu0 0.0
    %838 = vmatpush1.msra.mxu0 0.0
    %839 = vmatprep.subr.mxu0 0.0
    %840 = vmatpush1.msra.mxu0 %v60
    %841 = vmatprep.subr.mxu0 0.0
    %842 = vmatpush1.msra.mxu0 %v59
    %843 = vmatprep.subr.mxu0 0.0
    %844 = vmatpush1.msra.mxu0 %v58
    %845 = vmatprep.subr.mxu0 0.0
    %846 = vmatpush1.msra.mxu0 %v57
    %847 = vmatprep.subr.mxu0 0.0
    %848 = vmatpush2.msra.mxu0 0.0
    %849 = vmatprep.subr.mxu0 0.0
    %850 = vmatpush2.msra.mxu0 0.0
    %851 = vmatprep.subr.mxu0 0.0
    %852 = vmatpush2.msra.mxu0 0.0
    %853 = vmatprep.subr.mxu0 0.0
    %854 = vmatpush2.msra.mxu0 0.0
    %855 = vmatprep.subr.mxu0 0.0
    %856 = vmatpush2.msra.mxu0 0.0
    %857 = vmatprep.subr.mxu0 0.0
    %858 = vmatpush2.msra.mxu0 0.0
    %859 = vmatprep.subr.mxu0 0.0
    %860 = vmatpush2.msra.mxu0 0.0
    %861 = vmatprep.subr.mxu0 0.0
    %862 = vmatpush2.msra.mxu0 0.0
    %863 = vmatprep.subr.mxu0 0.0
    %864 = vmatpush2.msra.mxu0 0.0
    %865 = vmatprep.subr.mxu0 0.0
    %866 = vmatpush2.msra.mxu0 0.0
    %867 = vmatprep.subr.mxu0 0.0
    %868 = vmatpush2.msra.mxu0 0.0
    %869 = vmatprep.subr.mxu0 0.0
    %870 = vmatpush2.msra.mxu0 0.0
    %871 = vmatprep.subr.mxu0 0.0
    %872 = vmatpush2.msra.mxu0 0.0
    %873 = vmatprep.subr.mxu0 0.0
    %874 = vmatpush2.msra.mxu0 0.0
    %875 = vmatprep.subr.mxu0 0.0
    %876 = vmatpush2.msra.mxu0 0.0
    %877 = vmatprep.subr.mxu0 0.0
    %878 = vmatpush2.msra.mxu0 0.0
    %879 = vmatprep.mubr.f32.mxu0 0.0
    %880 = vmatmul.mubr.f32.gmra.mxu0 %v813
    %v881 = vpop.f32.mrf.mxu0
    %v882 = vadd.f32 0.0, %v881
    %v883 = vpop.f32.mrf.mxu0
    %884 = vdwg.mxu0
    %v885 = vadd.f32 %v542, %v882
    %v886 = vxor.u32 %v885, 2147483648
    %v887 = vmul.f32 %v886, 1.442695
    %v888 = vpow.pop %v887
    %v889 = vadd.f32 %v888, 1.0
    %v890 = vrcp.pop %v889
    %v891 = vmul.f32 1.0, %v890
    %v892 = vtanh.pop %v885
    %v893 = vmul.f32 %v891, %v633
    %895 = vrot.lane.b32.xlu0 %v892, 64
    %v896 = vpop.permute.xlu0 %895
    %v898 = vmul.f32 %v891, %v896
    %900 = vrot.lane.b32.xlu0 %v898, 32
    %v901 = vpop.permute.xlu0 %900
    %v903 = vadd.f32 %v893, %v901
    %v904 = vtanh.pop %v903
    %906 = vrot.lane.b32.xlu0 %v904, 64
    %v907 = vpop.permute.xlu0 %906
    %v909 = vmul.f32 %v891, %v907
    %910 = vmatprep.subr.mxu0 0.0
    %911 = vmatpush1.msra.mxu0 0.0
    %912 = vmatprep.subr.mxu0 0.0
    %913 = vmatpush1.msra.mxu0 0.0
    %914 = vmatprep.subr.mxu0 0.0
    %915 = vmatpush1.msra.mxu0 0.0
    %916 = vmatprep.subr.mxu0 0.0
    %917 = vmatpush1.msra.mxu0 0.0
    %918 = vmatprep.subr.mxu0 0.0
    %919 = vmatpush1.msra.mxu0 0.0
    %920 = vmatprep.subr.mxu0 0.0
    %921 = vmatpush1.msra.mxu0 0.0
    %922 = vmatprep.subr.mxu0 0.0
    %923 = vmatpush1.msra.mxu0 0.0
    %924 = vmatprep.subr.mxu0 0.0
    %925 = vmatpush1.msra.mxu0 0.0
    %926 = vmatprep.subr.mxu0 0.0
    %927 = vmatpush1.msra.mxu0 0.0
    %928 = vmatprep.subr.mxu0 0.0
    %929 = vmatpush1.msra.mxu0 0.0
    %930 = vmatprep.subr.mxu0 0.0
    %931 = vmatpush1.msra.mxu0 0.0
    %932 = vmatprep.subr.mxu0 0.0
    %933 = vmatpush1.msra.mxu0 0.0
    %934 = vmatprep.subr.mxu0 0.0
    %935 = vmatpush1.msra.mxu0 %v56
    %936 = vmatprep.subr.mxu0 0.0
    %937 = vmatpush1.msra.mxu0 %v55
    %938 = vmatprep.subr.mxu0 0.0
    %939 = vmatpush1.msra.mxu0 %v54
    %940 = vmatprep.subr.mxu0 0.0
    %941 = vmatpush1.msra.mxu0 %v53
    %942 = vmatprep.subr.mxu0 0.0
    %943 = vmatpush2.msra.mxu0 0.0
    %944 = vmatprep.subr.mxu0 0.0
    %945 = vmatpush2.msra.mxu0 0.0
    %946 = vmatprep.subr.mxu0 0.0
    %947 = vmatpush2.msra.mxu0 0.0
    %948 = vmatprep.subr.mxu0 0.0
    %949 = vmatpush2.msra.mxu0 0.0
    %950 = vmatprep.subr.mxu0 0.0
    %951 = vmatpush2.msra.mxu0 0.0
    %952 = vmatprep.subr.mxu0 0.0
    %953 = vmatpush2.msra.mxu0 0.0
    %954 = vmatprep.subr.mxu0 0.0
    %955 = vmatpush2.msra.mxu0 0.0
    %956 = vmatprep.subr.mxu0 0.0
    %957 = vmatpush2.msra.mxu0 0.0
    %958 = vmatprep.subr.mxu0 0.0
    %959 = vmatpush2.msra.mxu0 0.0
    %960 = vmatprep.subr.mxu0 0.0
    %961 = vmatpush2.msra.mxu0 0.0
    %962 = vmatprep.subr.mxu0 0.0
    %963 = vmatpush2.msra.mxu0 0.0
    %964 = vmatprep.subr.mxu0 0.0
    %965 = vmatpush2.msra.mxu0 0.0
    %966 = vmatprep.subr.mxu0 0.0
    %967 = vmatpush2.msra.mxu0 0.0
    %968 = vmatprep.subr.mxu0 0.0
    %969 = vmatpush2.msra.mxu0 0.0
    %970 = vmatprep.subr.mxu0 0.0
    %971 = vmatpush2.msra.mxu0 0.0
    %972 = vmatprep.subr.mxu0 0.0
    %973 = vmatpush2.msra.mxu0 0.0
    %974 = vmatprep.mubr.f32.mxu0 0.0
    %975 = vmatmul.mubr.f32.gmra.mxu0 %v738
    %v976 = vpop.f32.mrf.mxu0
    %v977 = vadd.f32 0.0, %v976
    %v978 = vpop.f32.mrf.mxu0
    %979 = vdwg.mxu0
    %v980 = vadd.f32 %v194, %v977
    %v981 = vxor.u32 %v980, 2147483648
    %v982 = vmul.f32 %v981, 1.442695
    %v983 = vpow.pop %v982
    %v984 = vadd.f32 %v983, 1.0
    %v985 = vrcp.pop %v984
    %v986 = vmul.f32 1.0, %v985
    %v987 = vtanh.pop %v980
    %v988 = vmul.f32 %v986, %v728
    %990 = vrot.lane.b32.xlu0 %v987, 64
    %v991 = vpop.permute.xlu0 %990
    %v993 = vmul.f32 %v986, %v991
    %995 = vrot.lane.b32.xlu0 %v993, 32
    %v996 = vpop.permute.xlu0 %995
    %v998 = vadd.f32 %v988, %v996
    %v999 = vtanh.pop %v998
    %1001 = vrot.lane.b32.xlu0 %v999, 64
    %v1002 = vpop.permute.xlu0 %1001
    %v1004 = vmul.f32 %v986, %v1002
    %1006 = vrot.lane.b32.xlu0 %v1004, 32
    %v1007 = vpop.permute.xlu0 %1006
    %v1008 = vsel %vm201, %v1007, 0
    %1010 = vmatprep.subr.mxu0 0.0
    %1011 = vmatpush1.msra.mxu0 0.0
    %1012 = vmatprep.subr.mxu0 0.0
    %1013 = vmatpush1.msra.mxu0 0.0
    %1014 = vmatprep.subr.mxu0 0.0
    %1015 = vmatpush1.msra.mxu0 0.0
    %1016 = vmatprep.subr.mxu0 0.0
    %1017 = vmatpush1.msra.mxu0 0.0
    %1018 = vmatprep.subr.mxu0 0.0
    %1019 = vmatpush1.msra.mxu0 0.0
    %1020 = vmatprep.subr.mxu0 0.0
    %1021 = vmatpush1.msra.mxu0 0.0
    %1022 = vmatprep.subr.mxu0 0.0
    %1023 = vmatpush1.msra.mxu0 0.0
    %1024 = vmatprep.subr.mxu0 0.0
    %1025 = vmatpush1.msra.mxu0 0.0
    %1026 = vmatprep.subr.mxu0 0.0
    %1027 = vmatpush1.msra.mxu0 0.0
    %1028 = vmatprep.subr.mxu0 0.0
    %1029 = vmatpush1.msra.mxu0 0.0
    %1030 = vmatprep.subr.mxu0 0.0
    %1031 = vmatpush1.msra.mxu0 0.0
    %1032 = vmatprep.subr.mxu0 0.0
    %1033 = vmatpush1.msra.mxu0 0.0
    %1034 = vmatprep.subr.mxu0 0.0
    %1035 = vmatpush1.msra.mxu0 %v52
    %1036 = vmatprep.subr.mxu0 0.0
    %1037 = vmatpush1.msra.mxu0 %v51
    %1038 = vmatprep.subr.mxu0 0.0
    %1039 = vmatpush1.msra.mxu0 %v50
    %1040 = vmatprep.subr.mxu0 0.0
    %1041 = vmatpush1.msra.mxu0 %v49
    %1042 = vmatprep.subr.mxu0 0.0
    %1043 = vmatpush2.msra.mxu0 0.0
    %1044 = vmatprep.subr.mxu0 0.0
    %1045 = vmatpush2.msra.mxu0 0.0
    %1046 = vmatprep.subr.mxu0 0.0
    %1047 = vmatpush2.msra.mxu0 0.0
    %1048 = vmatprep.subr.mxu0 0.0
    %1049 = vmatpush2.msra.mxu0 0.0
    %1050 = vmatprep.subr.mxu0 0.0
    %1051 = vmatpush2.msra.mxu0 0.0
    %1052 = vmatprep.subr.mxu0 0.0
    %1053 = vmatpush2.msra.mxu0 0.0
    %1054 = vmatprep.subr.mxu0 0.0
    %1055 = vmatpush2.msra.mxu0 0.0
    %1056 = vmatprep.subr.mxu0 0.0
    %1057 = vmatpush2.msra.mxu0 0.0
    %1058 = vmatprep.subr.mxu0 0.0
    %1059 = vmatpush2.msra.mxu0 0.0
    %1060 = vmatprep.subr.mxu0 0.0
    %1061 = vmatpush2.msra.mxu0 0.0
    %1062 = vmatprep.subr.mxu0 0.0
    %1063 = vmatpush2.msra.mxu0 0.0
    %1064 = vmatprep.subr.mxu0 0.0
    %1065 = vmatpush2.msra.mxu0 0.0
    %1066 = vmatprep.subr.mxu0 0.0
    %1067 = vmatpush2.msra.mxu0 0.0
    %1068 = vmatprep.subr.mxu0 0.0
    %1069 = vmatpush2.msra.mxu0 0.0
    %1070 = vmatprep.subr.mxu0 0.0
    %1071 = vmatpush2.msra.mxu0 0.0
    %1072 = vmatprep.subr.mxu0 0.0
    %1073 = vmatpush2.msra.mxu0 0.0
    %1074 = vmatprep.mubr.f32.mxu0 0.0
    %1075 = vmatmul.mubr.f32.gmra.mxu0 %v1008
    %v1076 = vpop.f32.mrf.mxu0
    %v1077 = vadd.f32 %v67, %v1076
    %v1078 = vpop.f32.mrf.mxu0
    %1079 = vdwg.mxu0
    %1081 = vrot.lane.b32.xlu0 %v909, 32
    %v1082 = vpop.permute.xlu0 %1081
    %v1083 = vsel %vm201, %v1082, 0
    %1085 = vmatprep.subr.mxu0 0.0
    %1086 = vmatpush1.msra.mxu0 0.0
    %1087 = vmatprep.subr.mxu0 0.0
    %1088 = vmatpush1.msra.mxu0 0.0
    %1089 = vmatprep.subr.mxu0 0.0
    %1090 = vmatpush1.msra.mxu0 0.0
    %1091 = vmatprep.subr.mxu0 0.0
    %1092 = vmatpush1.msra.mxu0 0.0
    %1093 = vmatprep.subr.mxu0 0.0
    %1094 = vmatpush1.msra.mxu0 0.0
    %1095 = vmatprep.subr.mxu0 0.0
    %1096 = vmatpush1.msra.mxu0 0.0
    %1097 = vmatprep.subr.mxu0 0.0
    %1098 = vmatpush1.msra.mxu0 0.0
    %1099 = vmatprep.subr.mxu0 0.0
    %1100 = vmatpush1.msra.mxu0 0.0
    %1101 = vmatprep.subr.mxu0 0.0
    %1102 = vmatpush1.msra.mxu0 0.0
    %1103 = vmatprep.subr.mxu0 0.0
    %1104 = vmatpush1.msra.mxu0 0.0
    %1105 = vmatprep.subr.mxu0 0.0
    %1106 = vmatpush1.msra.mxu0 0.0
    %1107 = vmatprep.subr.mxu0 0.0
    %1108 = vmatpush1.msra.mxu0 0.0
    %1109 = vmatprep.subr.mxu0 0.0
    %1110 = vmatpush1.msra.mxu0 %v60
    %1111 = vmatprep.subr.mxu0 0.0
    %1112 = vmatpush1.msra.mxu0 %v59
    %1113 = vmatprep.subr.mxu0 0.0
    %1114 = vmatpush1.msra.mxu0 %v58
    %1115 = vmatprep.subr.mxu0 0.0
    %1116 = vmatpush1.msra.mxu0 %v57
    %1117 = vmatprep.subr.mxu0 0.0
    %1118 = vmatpush2.msra.mxu0 0.0
    %1119 = vmatprep.subr.mxu0 0.0
    %1120 = vmatpush2.msra.mxu0 0.0
    %1121 = vmatprep.subr.mxu0 0.0
    %1122 = vmatpush2.msra.mxu0 0.0
    %1123 = vmatprep.subr.mxu0 0.0
    %1124 = vmatpush2.msra.mxu0 0.0
    %1125 = vmatprep.subr.mxu0 0.0
    %1126 = vmatpush2.msra.mxu0 0.0
    %1127 = vmatprep.subr.mxu0 0.0
    %1128 = vmatpush2.msra.mxu0 0.0
    %1129 = vmatprep.subr.mxu0 0.0
    %1130 = vmatpush2.msra.mxu0 0.0
    %1131 = vmatprep.subr.mxu0 0.0
    %1132 = vmatpush2.msra.mxu0 0.0
    %1133 = vmatprep.subr.mxu0 0.0
    %1134 = vmatpush2.msra.mxu0 0.0
    %1135 = vmatprep.subr.mxu0 0.0
    %1136 = vmatpush2.msra.mxu0 0.0
    %1137 = vmatprep.subr.mxu0 0.0
    %1138 = vmatpush2.msra.mxu0 0.0
    %1139 = vmatprep.subr.mxu0 0.0
    %1140 = vmatpush2.msra.mxu0 0.0
    %1141 = vmatprep.subr.mxu0 0.0
    %1142 = vmatpush2.msra.mxu0 0.0
    %1143 = vmatprep.subr.mxu0 0.0
    %1144 = vmatpush2.msra.mxu0 0.0
    %1145 = vmatprep.subr.mxu0 0.0
    %1146 = vmatpush2.msra.mxu0 0.0
    %1147 = vmatprep.subr.mxu0 0.0
    %1148 = vmatpush2.msra.mxu0 0.0
    %1149 = vmatprep.mubr.f32.mxu0 0.0
    %1150 = vmatmul.mubr.f32.gmra.mxu0 %v1083
    %v1151 = vpop.f32.mrf.mxu0
    %v1152 = vadd.f32 0.0, %v1151
    %v1153 = vpop.f32.mrf.mxu0
    %1154 = vdwg.mxu0
    %v1155 = vadd.f32 %v807, %v1152
    %v1156 = vxor.u32 %v1155, 2147483648
    %v1157 = vmul.f32 %v1156, 1.442695
    %v1158 = vpow.pop %v1157
    %v1159 = vadd.f32 %v1158, 1.0
    %v1160 = vrcp.pop %v1159
    %v1161 = vmul.f32 1.0, %v1160
    %v1162 = vtanh.pop %v1155
    %v1163 = vmul.f32 %v1161, %v903
    %1165 = vrot.lane.b32.xlu0 %v1162, 64
    %v1166 = vpop.permute.xlu0 %1165
    %v1168 = vmul.f32 %v1161, %v1166
    %1170 = vrot.lane.b32.xlu0 %v1168, 32
    %v1171 = vpop.permute.xlu0 %1170
    %v1173 = vadd.f32 %v1163, %v1171
    %v1174 = vtanh.pop %v1173
    %1176 = vrot.lane.b32.xlu0 %v1174, 64
    %v1177 = vpop.permute.xlu0 %1176
    %v1179 = vmul.f32 %v1161, %v1177
    %1180 = vmatprep.subr.mxu0 0.0
    %1181 = vmatpush1.msra.mxu0 0.0
    %1182 = vmatprep.subr.mxu0 0.0
    %1183 = vmatpush1.msra.mxu0 0.0
    %1184 = vmatprep.subr.mxu0 0.0
    %1185 = vmatpush1.msra.mxu0 0.0
    %1186 = vmatprep.subr.mxu0 0.0
    %1187 = vmatpush1.msra.mxu0 0.0
    %1188 = vmatprep.subr.mxu0 0.0
    %1189 = vmatpush1.msra.mxu0 0.0
    %1190 = vmatprep.subr.mxu0 0.0
    %1191 = vmatpush1.msra.mxu0 0.0
    %1192 = vmatprep.subr.mxu0 0.0
    %1193 = vmatpush1.msra.mxu0 0.0
    %1194 = vmatprep.subr.mxu0 0.0
    %1195 = vmatpush1.msra.mxu0 0.0
    %1196 = vmatprep.subr.mxu0 0.0
    %1197 = vmatpush1.msra.mxu0 0.0
    %1198 = vmatprep.subr.mxu0 0.0
    %1199 = vmatpush1.msra.mxu0 0.0
    %1200 = vmatprep.subr.mxu0 0.0
    %1201 = vmatpush1.msra.mxu0 0.0
    %1202 = vmatprep.subr.mxu0 0.0
    %1203 = vmatpush1.msra.mxu0 0.0
    %1204 = vmatprep.subr.mxu0 0.0
    %1205 = vmatpush1.msra.mxu0 %v56
    %1206 = vmatprep.subr.mxu0 0.0
    %1207 = vmatpush1.msra.mxu0 %v55
    %1208 = vmatprep.subr.mxu0 0.0
    %1209 = vmatpush1.msra.mxu0 %v54
    %1210 = vmatprep.subr.mxu0 0.0
    %1211 = vmatpush1.msra.mxu0 %v53
    %1212 = vmatprep.subr.mxu0 0.0
    %1213 = vmatpush2.msra.mxu0 0.0
    %1214 = vmatprep.subr.mxu0 0.0
    %1215 = vmatpush2.msra.mxu0 0.0
    %1216 = vmatprep.subr.mxu0 0.0
    %1217 = vmatpush2.msra.mxu0 0.0
    %1218 = vmatprep.subr.mxu0 0.0
    %1219 = vmatpush2.msra.mxu0 0.0
    %1220 = vmatprep.subr.mxu0 0.0
    %1221 = vmatpush2.msra.mxu0 0.0
    %1222 = vmatprep.subr.mxu0 0.0
    %1223 = vmatpush2.msra.mxu0 0.0
    %1224 = vmatprep.subr.mxu0 0.0
    %1225 = vmatpush2.msra.mxu0 0.0
    %1226 = vmatprep.subr.mxu0 0.0
    %1227 = vmatpush2.msra.mxu0 0.0
    %1228 = vmatprep.subr.mxu0 0.0
    %1229 = vmatpush2.msra.mxu0 0.0
    %1230 = vmatprep.subr.mxu0 0.0
    %1231 = vmatpush2.msra.mxu0 0.0
    %1232 = vmatprep.subr.mxu0 0.0
    %1233 = vmatpush2.msra.mxu0 0.0
    %1234 = vmatprep.subr.mxu0 0.0
    %1235 = vmatpush2.msra.mxu0 0.0
    %1236 = vmatprep.subr.mxu0 0.0
    %1237 = vmatpush2.msra.mxu0 0.0
    %1238 = vmatprep.subr.mxu0 0.0
    %1239 = vmatpush2.msra.mxu0 0.0
    %1240 = vmatprep.subr.mxu0 0.0
    %1241 = vmatpush2.msra.mxu0 0.0
    %1242 = vmatprep.subr.mxu0 0.0
    %1243 = vmatpush2.msra.mxu0 0.0
    %1244 = vmatprep.mubr.f32.mxu0 0.0
    %1245 = vmatmul.mubr.f32.gmra.mxu0 %v1008
    %v1246 = vpop.f32.mrf.mxu0
    %v1247 = vadd.f32 0.0, %v1246
    %v1248 = vpop.f32.mrf.mxu0
    %1249 = vdwg.mxu0
    %v1250 = vadd.f32 %v181, %v1247
    %v1251 = vxor.u32 %v1250, 2147483648
    %v1252 = vmul.f32 %v1251, 1.442695
    %v1253 = vpow.pop %v1252
    %v1254 = vadd.f32 %v1253, 1.0
    %v1255 = vrcp.pop %v1254
    %v1256 = vmul.f32 1.0, %v1255
    %v1257 = vtanh.pop %v1250
    %v1258 = vmul.f32 %v1256, %v998
    %1260 = vrot.lane.b32.xlu0 %v1257, 64
    %v1261 = vpop.permute.xlu0 %1260
    %v1263 = vmul.f32 %v1256, %v1261
    %1265 = vrot.lane.b32.xlu0 %v1263, 32
    %v1266 = vpop.permute.xlu0 %1265
    %v1268 = vadd.f32 %v1258, %v1266
    %v1269 = vtanh.pop %v1268
    %1271 = vrot.lane.b32.xlu0 %v1269, 64
    %v1272 = vpop.permute.xlu0 %1271
    %v1274 = vmul.f32 %v1256, %v1272
    %1276 = vrot.lane.b32.xlu0 %v1274, 32
    %v1277 = vpop.permute.xlu0 %1276
    %v1278 = vsel %vm201, %v1277, 0
    %1280 = vmatprep.subr.mxu0 0.0
    %1281 = vmatpush1.msra.mxu0 0.0
    %1282 = vmatprep.subr.mxu0 0.0
    %1283 = vmatpush1.msra.mxu0 0.0
    %1284 = vmatprep.subr.mxu0 0.0
    %1285 = vmatpush1.msra.mxu0 0.0
    %1286 = vmatprep.subr.mxu0 0.0
    %1287 = vmatpush1.msra.mxu0 0.0
    %1288 = vmatprep.subr.mxu0 0.0
    %1289 = vmatpush1.msra.mxu0 0.0
    %1290 = vmatprep.subr.mxu0 0.0
    %1291 = vmatpush1.msra.mxu0 0.0
    %1292 = vmatprep.subr.mxu0 0.0
    %1293 = vmatpush1.msra.mxu0 0.0
    %1294 = vmatprep.subr.mxu0 0.0
    %1295 = vmatpush1.msra.mxu0 0.0
    %1296 = vmatprep.subr.mxu0 0.0
    %1297 = vmatpush1.msra.mxu0 0.0
    %1298 = vmatprep.subr.mxu0 0.0
    %1299 = vmatpush1.msra.mxu0 0.0
    %1300 = vmatprep.subr.mxu0 0.0
    %1301 = vmatpush1.msra.mxu0 0.0
    %1302 = vmatprep.subr.mxu0 0.0
    %1303 = vmatpush1.msra.mxu0 0.0
    %1304 = vmatprep.subr.mxu0 0.0
    %1305 = vmatpush1.msra.mxu0 %v52
    %1306 = vmatprep.subr.mxu0 0.0
    %1307 = vmatpush1.msra.mxu0 %v51
    %1308 = vmatprep.subr.mxu0 0.0
    %1309 = vmatpush1.msra.mxu0 %v50
    %1310 = vmatprep.subr.mxu0 0.0
    %1311 = vmatpush1.msra.mxu0 %v49
    %1312 = vmatprep.subr.mxu0 0.0
    %1313 = vmatpush2.msra.mxu0 0.0
    %1314 = vmatprep.subr.mxu0 0.0
    %1315 = vmatpush2.msra.mxu0 0.0
    %1316 = vmatprep.subr.mxu0 0.0
    %1317 = vmatpush2.msra.mxu0 0.0
    %1318 = vmatprep.subr.mxu0 0.0
    %1319 = vmatpush2.msra.mxu0 0.0
    %1320 = vmatprep.subr.mxu0 0.0
    %1321 = vmatpush2.msra.mxu0 0.0
    %1322 = vmatprep.subr.mxu0 0.0
    %1323 = vmatpush2.msra.mxu0 0.0
    %1324 = vmatprep.subr.mxu0 0.0
    %1325 = vmatpush2.msra.mxu0 0.0
    %1326 = vmatprep.subr.mxu0 0.0
    %1327 = vmatpush2.msra.mxu0 0.0
    %1328 = vmatprep.subr.mxu0 0.0
    %1329 = vmatpush2.msra.mxu0 0.0
    %1330 = vmatprep.subr.mxu0 0.0
    %1331 = vmatpush2.msra.mxu0 0.0
    %1332 = vmatprep.subr.mxu0 0.0
    %1333 = vmatpush2.msra.mxu0 0.0
    %1334 = vmatprep.subr.mxu0 0.0
    %1335 = vmatpush2.msra.mxu0 0.0
    %1336 = vmatprep.subr.mxu0 0.0
    %1337 = vmatpush2.msra.mxu0 0.0
    %1338 = vmatprep.subr.mxu0 0.0
    %1339 = vmatpush2.msra.mxu0 0.0
    %1340 = vmatprep.subr.mxu0 0.0
    %1341 = vmatpush2.msra.mxu0 0.0
    %1342 = vmatprep.subr.mxu0 0.0
    %1343 = vmatpush2.msra.mxu0 0.0
    %1344 = vmatprep.mubr.f32.mxu0 0.0
    %1345 = vmatmul.mubr.f32.gmra.mxu0 %v1278
    %v1346 = vpop.f32.mrf.mxu0
    %v1347 = vadd.f32 %v67, %v1346
    %v1348 = vpop.f32.mrf.mxu0
    %1349 = vdwg.mxu0
    %1351 = vrot.lane.b32.xlu0 %v1179, 32
    %v1352 = vpop.permute.xlu0 %1351
    %v1353 = vsel %vm201, %v1352, 0
    %1355 = vmatprep.subr.mxu0 0.0
    %1356 = vmatpush1.msra.mxu0 0.0
    %1357 = vmatprep.subr.mxu0 0.0
    %1358 = vmatpush1.msra.mxu0 0.0
    %1359 = vmatprep.subr.mxu0 0.0
    %1360 = vmatpush1.msra.mxu0 0.0
    %1361 = vmatprep.subr.mxu0 0.0
    %1362 = vmatpush1.msra.mxu0 0.0
    %1363 = vmatprep.subr.mxu0 0.0
    %1364 = vmatpush1.msra.mxu0 0.0
    %1365 = vmatprep.subr.mxu0 0.0
    %1366 = vmatpush1.msra.mxu0 0.0
    %1367 = vmatprep.subr.mxu0 0.0
    %1368 = vmatpush1.msra.mxu0 0.0
    %1369 = vmatprep.subr.mxu0 0.0
    %1370 = vmatpush1.msra.mxu0 0.0
    %1371 = vmatprep.subr.mxu0 0.0
    %1372 = vmatpush1.msra.mxu0 0.0
    %1373 = vmatprep.subr.mxu0 0.0
    %1374 = vmatpush1.msra.mxu0 0.0
    %1375 = vmatprep.subr.mxu0 0.0
    %1376 = vmatpush1.msra.mxu0 0.0
    %1377 = vmatprep.subr.mxu0 0.0
    %1378 = vmatpush1.msra.mxu0 0.0
    %1379 = vmatprep.subr.mxu0 0.0
    %1380 = vmatpush1.msra.mxu0 %v60
    %1381 = vmatprep.subr.mxu0 0.0
    %1382 = vmatpush1.msra.mxu0 %v59
    %1383 = vmatprep.subr.mxu0 0.0
    %1384 = vmatpush1.msra.mxu0 %v58
    %1385 = vmatprep.subr.mxu0 0.0
    %1386 = vmatpush1.msra.mxu0 %v57
    %1387 = vmatprep.subr.mxu0 0.0
    %1388 = vmatpush2.msra.mxu0 0.0
    %1389 = vmatprep.subr.mxu0 0.0
    %1390 = vmatpush2.msra.mxu0 0.0
    %1391 = vmatprep.subr.mxu0 0.0
    %1392 = vmatpush2.msra.mxu0 0.0
    %1393 = vmatprep.subr.mxu0 0.0
    %1394 = vmatpush2.msra.mxu0 0.0
    %1395 = vmatprep.subr.mxu0 0.0
    %1396 = vmatpush2.msra.mxu0 0.0
    %1397 = vmatprep.subr.mxu0 0.0
    %1398 = vmatpush2.msra.mxu0 0.0
    %1399 = vmatprep.subr.mxu0 0.0
    %1400 = vmatpush2.msra.mxu0 0.0
    %1401 = vmatprep.subr.mxu0 0.0
    %1402 = vmatpush2.msra.mxu0 0.0
    %1403 = vmatprep.subr.mxu0 0.0
    %1404 = vmatpush2.msra.mxu0 0.0
    %1405 = vmatprep.subr.mxu0 0.0
    %1406 = vmatpush2.msra.mxu0 0.0
    %1407 = vmatprep.subr.mxu0 0.0
    %1408 = vmatpush2.msra.mxu0 0.0
    %1409 = vmatprep.subr.mxu0 0.0
    %1410 = vmatpush2.msra.mxu0 0.0
    %1411 = vmatprep.subr.mxu0 0.0
    %1412 = vmatpush2.msra.mxu0 0.0
    %1413 = vmatprep.subr.mxu0 0.0
    %1414 = vmatpush2.msra.mxu0 0.0
    %1415 = vmatprep.subr.mxu0 0.0
    %1416 = vmatpush2.msra.mxu0 0.0
    %1417 = vmatprep.subr.mxu0 0.0
    %1418 = vmatpush2.msra.mxu0 0.0
    %1419 = vmatprep.mubr.f32.mxu0 0.0
    %1420 = vmatmul.mubr.f32.gmra.mxu0 %v1353
    %v1421 = vpop.f32.mrf.mxu0
    %v1422 = vadd.f32 0.0, %v1421
    %v1423 = vpop.f32.mrf.mxu0
    %1424 = vdwg.mxu0
    %v1425 = vadd.f32 %v1077, %v1422
    %v1426 = vxor.u32 %v1425, 2147483648
    %v1427 = vmul.f32 %v1426, 1.442695
    %v1428 = vpow.pop %v1427
    %v1429 = vadd.f32 %v1428, 1.0
    %v1430 = vrcp.pop %v1429
    %v1431 = vmul.f32 1.0, %v1430
    %v1432 = vtanh.pop %v1425
    %v1433 = vmul.f32 %v1431, %v1173
    %1435 = vrot.lane.b32.xlu0 %v1432, 64
    %v1436 = vpop.permute.xlu0 %1435
    %v1438 = vmul.f32 %v1431, %v1436
    %1440 = vrot.lane.b32.xlu0 %v1438, 32
    %v1441 = vpop.permute.xlu0 %1440
    %v1443 = vadd.f32 %v1433, %v1441
    %v1444 = vtanh.pop %v1443
    %1446 = vrot.lane.b32.xlu0 %v1444, 64
    %v1447 = vpop.permute.xlu0 %1446
    %v1449 = vmul.f32 %v1431, %v1447
    %1450 = vmatprep.subr.mxu0 0.0
    %1451 = vmatpush1.msra.mxu0 0.0
    %1452 = vmatprep.subr.mxu0 0.0
    %1453 = vmatpush1.msra.mxu0 0.0
    %1454 = vmatprep.subr.mxu0 0.0
    %1455 = vmatpush1.msra.mxu0 0.0
    %1456 = vmatprep.subr.mxu0 0.0
    %1457 = vmatpush1.msra.mxu0 0.0
    %1458 = vmatprep.subr.mxu0 0.0
    %1459 = vmatpush1.msra.mxu0 0.0
    %1460 = vmatprep.subr.mxu0 0.0
    %1461 = vmatpush1.msra.mxu0 0.0
    %1462 = vmatprep.subr.mxu0 0.0
    %1463 = vmatpush1.msra.mxu0 0.0
    %1464 = vmatprep.subr.mxu0 0.0
    %1465 = vmatpush1.msra.mxu0 0.0
    %1466 = vmatprep.subr.mxu0 0.0
    %1467 = vmatpush1.msra.mxu0 0.0
    %1468 = vmatprep.subr.mxu0 0.0
    %1469 = vmatpush1.msra.mxu0 0.0
    %1470 = vmatprep.subr.mxu0 0.0
    %1471 = vmatpush1.msra.mxu0 0.0
    %1472 = vmatprep.subr.mxu0 0.0
    %1473 = vmatpush1.msra.mxu0 0.0
    %1474 = vmatprep.subr.mxu0 0.0
    %1475 = vmatpush1.msra.mxu0 %v56
    %1476 = vmatprep.subr.mxu0 0.0
    %1477 = vmatpush1.msra.mxu0 %v55
    %1478 = vmatprep.subr.mxu0 0.0
    %1479 = vmatpush1.msra.mxu0 %v54
    %1480 = vmatprep.subr.mxu0 0.0
    %1481 = vmatpush1.msra.mxu0 %v53
    %1482 = vmatprep.subr.mxu0 0.0
    %1483 = vmatpush2.msra.mxu0 0.0
    %1484 = vmatprep.subr.mxu0 0.0
    %1485 = vmatpush2.msra.mxu0 0.0
    %1486 = vmatprep.subr.mxu0 0.0
    %1487 = vmatpush2.msra.mxu0 0.0
    %1488 = vmatprep.subr.mxu0 0.0
    %1489 = vmatpush2.msra.mxu0 0.0
    %1490 = vmatprep.subr.mxu0 0.0
    %1491 = vmatpush2.msra.mxu0 0.0
    %1492 = vmatprep.subr.mxu0 0.0
    %1493 = vmatpush2.msra.mxu0 0.0
    %1494 = vmatprep.subr.mxu0 0.0
    %1495 = vmatpush2.msra.mxu0 0.0
    %1496 = vmatprep.subr.mxu0 0.0
    %1497 = vmatpush2.msra.mxu0 0.0
    %1498 = vmatprep.subr.mxu0 0.0
    %1499 = vmatpush2.msra.mxu0 0.0
    %1500 = vmatprep.subr.mxu0 0.0
    %1501 = vmatpush2.msra.mxu0 0.0
    %1502 = vmatprep.subr.mxu0 0.0
    %1503 = vmatpush2.msra.mxu0 0.0
    %1504 = vmatprep.subr.mxu0 0.0
    %1505 = vmatpush2.msra.mxu0 0.0
    %1506 = vmatprep.subr.mxu0 0.0
    %1507 = vmatpush2.msra.mxu0 0.0
    %1508 = vmatprep.subr.mxu0 0.0
    %1509 = vmatpush2.msra.mxu0 0.0
    %1510 = vmatprep.subr.mxu0 0.0
    %1511 = vmatpush2.msra.mxu0 0.0
    %1512 = vmatprep.subr.mxu0 0.0
    %1513 = vmatpush2.msra.mxu0 0.0
    %1514 = vmatprep.mubr.f32.mxu0 0.0
    %1515 = vmatmul.mubr.f32.gmra.mxu0 %v1278
    %v1516 = vpop.f32.mrf.mxu0
    %v1517 = vadd.f32 0.0, %v1516
    %v1518 = vpop.f32.mrf.mxu0
    %1519 = vdwg.mxu0
    %v1520 = vadd.f32 %v195, %v1517
    %v1521 = vxor.u32 %v1520, 2147483648
    %v1522 = vmul.f32 %v1521, 1.442695
    %v1523 = vpow.pop %v1522
    %v1524 = vadd.f32 %v1523, 1.0
    %v1525 = vrcp.pop %v1524
    %v1526 = vmul.f32 1.0, %v1525
    %v1527 = vtanh.pop %v1520
    %v1528 = vmul.f32 %v1526, %v1268
    %1530 = vrot.lane.b32.xlu0 %v1527, 64
    %v1531 = vpop.permute.xlu0 %1530
    %v1533 = vmul.f32 %v1526, %v1531
    %1535 = vrot.lane.b32.xlu0 %v1533, 32
    %v1536 = vpop.permute.xlu0 %1535
    %v1538 = vadd.f32 %v1528, %v1536
    %v1539 = vtanh.pop %v1538
    %1541 = vrot.lane.b32.xlu0 %v1539, 64
    %v1542 = vpop.permute.xlu0 %1541
    %v1544 = vmul.f32 %v1526, %v1542
    %1546 = vrot.lane.b32.xlu0 %v1544, 32
    %v1547 = vpop.permute.xlu0 %1546
    %v1548 = vsel %vm201, %v1547, 0
    %1550 = vmatprep.subr.mxu0 0.0
    %1551 = vmatpush1.msra.mxu0 0.0
    %1552 = vmatprep.subr.mxu0 0.0
    %1553 = vmatpush1.msra.mxu0 0.0
    %1554 = vmatprep.subr.mxu0 0.0
    %1555 = vmatpush1.msra.mxu0 0.0
    %1556 = vmatprep.subr.mxu0 0.0
    %1557 = vmatpush1.msra.mxu0 0.0
    %1558 = vmatprep.subr.mxu0 0.0
    %1559 = vmatpush1.msra.mxu0 0.0
    %1560 = vmatprep.subr.mxu0 0.0
    %1561 = vmatpush1.msra.mxu0 0.0
    %1562 = vmatprep.subr.mxu0 0.0
    %1563 = vmatpush1.msra.mxu0 0.0
    %1564 = vmatprep.subr.mxu0 0.0
    %1565 = vmatpush1.msra.mxu0 0.0
    %1566 = vmatprep.subr.mxu0 0.0
    %1567 = vmatpush1.msra.mxu0 0.0
    %1568 = vmatprep.subr.mxu0 0.0
    %1569 = vmatpush1.msra.mxu0 0.0
    %1570 = vmatprep.subr.mxu0 0.0
    %1571 = vmatpush1.msra.mxu0 0.0
    %1572 = vmatprep.subr.mxu0 0.0
    %1573 = vmatpush1.msra.mxu0 0.0
    %1574 = vmatprep.subr.mxu0 0.0
    %1575 = vmatpush1.msra.mxu0 %v52
    %1576 = vmatprep.subr.mxu0 0.0
    %1577 = vmatpush1.msra.mxu0 %v51
    %1578 = vmatprep.subr.mxu0 0.0
    %1579 = vmatpush1.msra.mxu0 %v50
    %1580 = vmatprep.subr.mxu0 0.0
    %1581 = vmatpush1.msra.mxu0 %v49
    %1582 = vmatprep.subr.mxu0 0.0
    %1583 = vmatpush2.msra.mxu0 0.0
    %1584 = vmatprep.subr.mxu0 0.0
    %1585 = vmatpush2.msra.mxu0 0.0
    %1586 = vmatprep.subr.mxu0 0.0
    %1587 = vmatpush2.msra.mxu0 0.0
    %1588 = vmatprep.subr.mxu0 0.0
    %1589 = vmatpush2.msra.mxu0 0.0
    %1590 = vmatprep.subr.mxu0 0.0
    %1591 = vmatpush2.msra.mxu0 0.0
    %1592 = vmatprep.subr.mxu0 0.0
    %1593 = vmatpush2.msra.mxu0 0.0
    %1594 = vmatprep.subr.mxu0 0.0
    %1595 = vmatpush2.msra.mxu0 0.0
    %1596 = vmatprep.subr.mxu0 0.0
    %1597 = vmatpush2.msra.mxu0 0.0
    %1598 = vmatprep.subr.mxu0 0.0
    %1599 = vmatpush2.msra.mxu0 0.0
    %1600 = vmatprep.subr.mxu0 0.0
    %1601 = vmatpush2.msra.mxu0 0.0
    %1602 = vmatprep.subr.mxu0 0.0
    %1603 = vmatpush2.msra.mxu0 0.0
    %1604 = vmatprep.subr.mxu0 0.0
    %1605 = vmatpush2.msra.mxu0 0.0
    %1606 = vmatprep.subr.mxu0 0.0
    %1607 = vmatpush2.msra.mxu0 0.0
    %1608 = vmatprep.subr.mxu0 0.0
    %1609 = vmatpush2.msra.mxu0 0.0
    %1610 = vmatprep.subr.mxu0 0.0
    %1611 = vmatpush2.msra.mxu0 0.0
    %1612 = vmatprep.subr.mxu0 0.0
    %1613 = vmatpush2.msra.mxu0 0.0
    %1614 = vmatprep.mubr.f32.mxu0 0.0
    %1615 = vmatmul.mubr.f32.gmra.mxu0 %v1548
    %v1616 = vpop.f32.mrf.mxu0
    %v1617 = vadd.f32 %v67, %v1616
    %v1618 = vpop.f32.mrf.mxu0
    %1619 = vdwg.mxu0
    %1621 = vrot.lane.b32.xlu0 %v1449, 32
    %v1622 = vpop.permute.xlu0 %1621
    %v1623 = vsel %vm201, %v1622, 0
    %1625 = vmatprep.subr.mxu0 0.0
    %1626 = vmatpush1.msra.mxu0 0.0
    %1627 = vmatprep.subr.mxu0 0.0
    %1628 = vmatpush1.msra.mxu0 0.0
    %1629 = vmatprep.subr.mxu0 0.0
    %1630 = vmatpush1.msra.mxu0 0.0
    %1631 = vmatprep.subr.mxu0 0.0
    %1632 = vmatpush1.msra.mxu0 0.0
    %1633 = vmatprep.subr.mxu0 0.0
    %1634 = vmatpush1.msra.mxu0 0.0
    %1635 = vmatprep.subr.mxu0 0.0
    %1636 = vmatpush1.msra.mxu0 0.0
    %1637 = vmatprep.subr.mxu0 0.0
    %1638 = vmatpush1.msra.mxu0 0.0
    %1639 = vmatprep.subr.mxu0 0.0
    %1640 = vmatpush1.msra.mxu0 0.0
    %1641 = vmatprep.subr.mxu0 0.0
    %1642 = vmatpush1.msra.mxu0 0.0
    %1643 = vmatprep.subr.mxu0 0.0
    %1644 = vmatpush1.msra.mxu0 0.0
    %1645 = vmatprep.subr.mxu0 0.0
    %1646 = vmatpush1.msra.mxu0 0.0
    %1647 = vmatprep.subr.mxu0 0.0
    %1648 = vmatpush1.msra.mxu0 0.0
    %1649 = vmatprep.subr.mxu0 0.0
    %1650 = vmatpush1.msra.mxu0 %v60
    %1651 = vmatprep.subr.mxu0 0.0
    %1652 = vmatpush1.msra.mxu0 %v59
    %1653 = vmatprep.subr.mxu0 0.0
    %1654 = vmatpush1.msra.mxu0 %v58
    %1655 = vmatprep.subr.mxu0 0.0
    %1656 = vmatpush1.msra.mxu0 %v57
    %1657 = vmatprep.subr.mxu0 0.0
    %1658 = vmatpush2.msra.mxu0 0.0
    %1659 = vmatprep.subr.mxu0 0.0
    %1660 = vmatpush2.msra.mxu0 0.0
    %1661 = vmatprep.subr.mxu0 0.0
    %1662 = vmatpush2.msra.mxu0 0.0
    %1663 = vmatprep.subr.mxu0 0.0
    %1664 = vmatpush2.msra.mxu0 0.0
    %1665 = vmatprep.subr.mxu0 0.0
    %1666 = vmatpush2.msra.mxu0 0.0
    %1667 = vmatprep.subr.mxu0 0.0
    %1668 = vmatpush2.msra.mxu0 0.0
    %1669 = vmatprep.subr.mxu0 0.0
    %1670 = vmatpush2.msra.mxu0 0.0
    %1671 = vmatprep.subr.mxu0 0.0
    %1672 = vmatpush2.msra.mxu0 0.0
    %1673 = vmatprep.subr.mxu0 0.0
    %1674 = vmatpush2.msra.mxu0 0.0
    %1675 = vmatprep.subr.mxu0 0.0
    %1676 = vmatpush2.msra.mxu0 0.0
    %1677 = vmatprep.subr.mxu0 0.0
    %1678 = vmatpush2.msra.mxu0 0.0
    %1679 = vmatprep.subr.mxu0 0.0
    %1680 = vmatpush2.msra.mxu0 0.0
    %1681 = vmatprep.subr.mxu0 0.0
    %1682 = vmatpush2.msra.mxu0 0.0
    %1683 = vmatprep.subr.mxu0 0.0
    %1684 = vmatpush2.msra.mxu0 0.0
    %1685 = vmatprep.subr.mxu0 0.0
    %1686 = vmatpush2.msra.mxu0 0.0
    %1687 = vmatprep.subr.mxu0 0.0
    %1688 = vmatpush2.msra.mxu0 0.0
    %1689 = vmatprep.mubr.f32.mxu0 0.0
    %1690 = vmatmul.mubr.f32.gmra.mxu0 %v1623
    %v1691 = vpop.f32.mrf.mxu0
    %v1692 = vadd.f32 0.0, %v1691
    %v1693 = vpop.f32.mrf.mxu0
    %1694 = vdwg.mxu0
    %v1695 = vadd.f32 %v1347, %v1692
    %v1696 = vxor.u32 %v1695, 2147483648
    %v1697 = vmul.f32 %v1696, 1.442695
    %v1698 = vpow.pop %v1697
    %v1699 = vadd.f32 %v1698, 1.0
    %v1700 = vrcp.pop %v1699
    %v1701 = vmul.f32 1.0, %v1700
    %v1702 = vtanh.pop %v1695
    %v1703 = vmul.f32 %v1701, %v1443
    %1705 = vrot.lane.b32.xlu0 %v1702, 64
    %v1706 = vpop.permute.xlu0 %1705
    %v1708 = vmul.f32 %v1701, %v1706
    %1710 = vrot.lane.b32.xlu0 %v1708, 32
    %v1711 = vpop.permute.xlu0 %1710
    %v1713 = vadd.f32 %v1703, %v1711
    %v1714 = vtanh.pop %v1713
    %1716 = vrot.lane.b32.xlu0 %v1714, 64
    %v1717 = vpop.permute.xlu0 %1716
    %v1719 = vmul.f32 %v1701, %v1717
    %1720 = vmatprep.subr.mxu0 0.0
    %1721 = vmatpush1.msra.mxu0 0.0
    %1722 = vmatprep.subr.mxu0 0.0
    %1723 = vmatpush1.msra.mxu0 0.0
    %1724 = vmatprep.subr.mxu0 0.0
    %1725 = vmatpush1.msra.mxu0 0.0
    %1726 = vmatprep.subr.mxu0 0.0
    %1727 = vmatpush1.msra.mxu0 0.0
    %1728 = vmatprep.subr.mxu0 0.0
    %1729 = vmatpush1.msra.mxu0 0.0
    %1730 = vmatprep.subr.mxu0 0.0
    %1731 = vmatpush1.msra.mxu0 0.0
    %1732 = vmatprep.subr.mxu0 0.0
    %1733 = vmatpush1.msra.mxu0 0.0
    %1734 = vmatprep.subr.mxu0 0.0
    %1735 = vmatpush1.msra.mxu0 0.0
    %1736 = vmatprep.subr.mxu0 0.0
    %1737 = vmatpush1.msra.mxu0 0.0
    %1738 = vmatprep.subr.mxu0 0.0
    %1739 = vmatpush1.msra.mxu0 0.0
    %1740 = vmatprep.subr.mxu0 0.0
    %1741 = vmatpush1.msra.mxu0 0.0
    %1742 = vmatprep.subr.mxu0 0.0
    %1743 = vmatpush1.msra.mxu0 0.0
    %1744 = vmatprep.subr.mxu0 0.0
    %1745 = vmatpush1.msra.mxu0 %v56
    %1746 = vmatprep.subr.mxu0 0.0
    %1747 = vmatpush1.msra.mxu0 %v55
    %1748 = vmatprep.subr.mxu0 0.0
    %1749 = vmatpush1.msra.mxu0 %v54
    %1750 = vmatprep.subr.mxu0 0.0
    %1751 = vmatpush1.msra.mxu0 %v53
    %1752 = vmatprep.subr.mxu0 0.0
    %1753 = vmatpush2.msra.mxu0 0.0
    %1754 = vmatprep.subr.mxu0 0.0
    %1755 = vmatpush2.msra.mxu0 0.0
    %1756 = vmatprep.subr.mxu0 0.0
    %1757 = vmatpush2.msra.mxu0 0.0
    %1758 = vmatprep.subr.mxu0 0.0
    %1759 = vmatpush2.msra.mxu0 0.0
    %1760 = vmatprep.subr.mxu0 0.0
    %1761 = vmatpush2.msra.mxu0 0.0
    %1762 = vmatprep.subr.mxu0 0.0
    %1763 = vmatpush2.msra.mxu0 0.0
    %1764 = vmatprep.subr.mxu0 0.0
    %1765 = vmatpush2.msra.mxu0 0.0
    %1766 = vmatprep.subr.mxu0 0.0
    %1767 = vmatpush2.msra.mxu0 0.0
    %1768 = vmatprep.subr.mxu0 0.0
    %1769 = vmatpush2.msra.mxu0 0.0
    %1770 = vmatprep.subr.mxu0 0.0
    %1771 = vmatpush2.msra.mxu0 0.0
    %1772 = vmatprep.subr.mxu0 0.0
    %1773 = vmatpush2.msra.mxu0 0.0
    %1774 = vmatprep.subr.mxu0 0.0
    %1775 = vmatpush2.msra.mxu0 0.0
    %1776 = vmatprep.subr.mxu0 0.0
    %1777 = vmatpush2.msra.mxu0 0.0
    %1778 = vmatprep.subr.mxu0 0.0
    %1779 = vmatpush2.msra.mxu0 0.0
    %1780 = vmatprep.subr.mxu0 0.0
    %1781 = vmatpush2.msra.mxu0 0.0
    %1782 = vmatprep.subr.mxu0 0.0
    %1783 = vmatpush2.msra.mxu0 0.0
    %1784 = vmatprep.mubr.f32.mxu0 0.0
    %1785 = vmatmul.mubr.f32.gmra.mxu0 %v1548
    %v1786 = vpop.f32.mrf.mxu0
    %v1787 = vadd.f32 0.0, %v1786
    %v1788 = vpop.f32.mrf.mxu0
    %1789 = vdwg.mxu0
    %v1790 = vadd.f32 %v186, %v1787
    %v1791 = vxor.u32 %v1790, 2147483648
    %v1792 = vmul.f32 %v1791, 1.442695
    %v1793 = vpow.pop %v1792
    %v1794 = vadd.f32 %v1793, 1.0
    %v1795 = vrcp.pop %v1794
    %v1796 = vmul.f32 1.0, %v1795
    %v1797 = vtanh.pop %v1790
    %v1798 = vmul.f32 %v1796, %v1538
    %1800 = vrot.lane.b32.xlu0 %v1797, 64
    %v1801 = vpop.permute.xlu0 %1800
    %v1803 = vmul.f32 %v1796, %v1801
    %1805 = vrot.lane.b32.xlu0 %v1803, 32
    %v1806 = vpop.permute.xlu0 %1805
    %v1808 = vadd.f32 %v1798, %v1806
    %v1809 = vtanh.pop %v1808
    %1811 = vrot.lane.b32.xlu0 %v1809, 64
    %v1812 = vpop.permute.xlu0 %1811
    %v1814 = vmul.f32 %v1796, %v1812
    %1816 = vrot.lane.b32.xlu0 %v1814, 32
    %v1817 = vpop.permute.xlu0 %1816
    %v1818 = vsel %vm201, %v1817, 0
    %1820 = vmatprep.subr.mxu0 0.0
    %1821 = vmatpush1.msra.mxu0 0.0
    %1822 = vmatprep.subr.mxu0 0.0
    %1823 = vmatpush1.msra.mxu0 0.0
    %1824 = vmatprep.subr.mxu0 0.0
    %1825 = vmatpush1.msra.mxu0 0.0
    %1826 = vmatprep.subr.mxu0 0.0
    %1827 = vmatpush1.msra.mxu0 0.0
    %1828 = vmatprep.subr.mxu0 0.0
    %1829 = vmatpush1.msra.mxu0 0.0
    %1830 = vmatprep.subr.mxu0 0.0
    %1831 = vmatpush1.msra.mxu0 0.0
    %1832 = vmatprep.subr.mxu0 0.0
    %1833 = vmatpush1.msra.mxu0 0.0
    %1834 = vmatprep.subr.mxu0 0.0
    %1835 = vmatpush1.msra.mxu0 0.0
    %1836 = vmatprep.subr.mxu0 0.0
    %1837 = vmatpush1.msra.mxu0 0.0
    %1838 = vmatprep.subr.mxu0 0.0
    %1839 = vmatpush1.msra.mxu0 0.0
    %1840 = vmatprep.subr.mxu0 0.0
    %1841 = vmatpush1.msra.mxu0 0.0
    %1842 = vmatprep.subr.mxu0 0.0
    %1843 = vmatpush1.msra.mxu0 0.0
    %1844 = vmatprep.subr.mxu0 0.0
    %1845 = vmatpush1.msra.mxu0 %v52
    %1846 = vmatprep.subr.mxu0 0.0
    %1847 = vmatpush1.msra.mxu0 %v51
    %1848 = vmatprep.subr.mxu0 0.0
    %1849 = vmatpush1.msra.mxu0 %v50
    %1850 = vmatprep.subr.mxu0 0.0
    %1851 = vmatpush1.msra.mxu0 %v49
    %1852 = vmatprep.subr.mxu0 0.0
    %1853 = vmatpush2.msra.mxu0 0.0
    %1854 = vmatprep.subr.mxu0 0.0
    %1855 = vmatpush2.msra.mxu0 0.0
    %1856 = vmatprep.subr.mxu0 0.0
    %1857 = vmatpush2.msra.mxu0 0.0
    %1858 = vmatprep.subr.mxu0 0.0
    %1859 = vmatpush2.msra.mxu0 0.0
    %1860 = vmatprep.subr.mxu0 0.0
    %1861 = vmatpush2.msra.mxu0 0.0
    %1862 = vmatprep.subr.mxu0 0.0
    %1863 = vmatpush2.msra.mxu0 0.0
    %1864 = vmatprep.subr.mxu0 0.0
    %1865 = vmatpush2.msra.mxu0 0.0
    %1866 = vmatprep.subr.mxu0 0.0
    %1867 = vmatpush2.msra.mxu0 0.0
    %1868 = vmatprep.subr.mxu0 0.0
    %1869 = vmatpush2.msra.mxu0 0.0
    %1870 = vmatprep.subr.mxu0 0.0
    %1871 = vmatpush2.msra.mxu0 0.0
    %1872 = vmatprep.subr.mxu0 0.0
    %1873 = vmatpush2.msra.mxu0 0.0
    %1874 = vmatprep.subr.mxu0 0.0
    %1875 = vmatpush2.msra.mxu0 0.0
    %1876 = vmatprep.subr.mxu0 0.0
    %1877 = vmatpush2.msra.mxu0 0.0
    %1878 = vmatprep.subr.mxu0 0.0
    %1879 = vmatpush2.msra.mxu0 0.0
    %1880 = vmatprep.subr.mxu0 0.0
    %1881 = vmatpush2.msra.mxu0 0.0
    %1882 = vmatprep.subr.mxu0 0.0
    %1883 = vmatpush2.msra.mxu0 0.0
    %1884 = vmatprep.mubr.f32.mxu0 0.0
    %1885 = vmatmul.mubr.f32.gmra.mxu0 %v1818
    %v1886 = vpop.f32.mrf.mxu0
    %v1887 = vadd.f32 %v67, %v1886
    %v1888 = vpop.f32.mrf.mxu0
    %1889 = vdwg.mxu0
    %1891 = vrot.lane.b32.xlu0 %v1719, 32
    %v1892 = vpop.permute.xlu0 %1891
    %v1893 = vsel %vm201, %v1892, 0
    %1895 = vmatprep.subr.mxu0 0.0
    %1896 = vmatpush1.msra.mxu0 0.0
    %1897 = vmatprep.subr.mxu0 0.0
    %1898 = vmatpush1.msra.mxu0 0.0
    %1899 = vmatprep.subr.mxu0 0.0
    %1900 = vmatpush1.msra.mxu0 0.0
    %1901 = vmatprep.subr.mxu0 0.0
    %1902 = vmatpush1.msra.mxu0 0.0
    %1903 = vmatprep.subr.mxu0 0.0
    %1904 = vmatpush1.msra.mxu0 0.0
    %1905 = vmatprep.subr.mxu0 0.0
    %1906 = vmatpush1.msra.mxu0 0.0
    %1907 = vmatprep.subr.mxu0 0.0
    %1908 = vmatpush1.msra.mxu0 0.0
    %1909 = vmatprep.subr.mxu0 0.0
    %1910 = vmatpush1.msra.mxu0 0.0
    %1911 = vmatprep.subr.mxu0 0.0
    %1912 = vmatpush1.msra.mxu0 0.0
    %1913 = vmatprep.subr.mxu0 0.0
    %1914 = vmatpush1.msra.mxu0 0.0
    %1915 = vmatprep.subr.mxu0 0.0
    %1916 = vmatpush1.msra.mxu0 0.0
    %1917 = vmatprep.subr.mxu0 0.0
    %1918 = vmatpush1.msra.mxu0 0.0
    %1919 = vmatprep.subr.mxu0 0.0
    %1920 = vmatpush1.msra.mxu0 %v60
    %1921 = vmatprep.subr.mxu0 0.0
    %1922 = vmatpush1.msra.mxu0 %v59
    %1923 = vmatprep.subr.mxu0 0.0
    %1924 = vmatpush1.msra.mxu0 %v58
    %1925 = vmatprep.subr.mxu0 0.0
    %1926 = vmatpush1.msra.mxu0 %v57
    %1927 = vmatprep.subr.mxu0 0.0
    %1928 = vmatpush2.msra.mxu0 0.0
    %1929 = vmatprep.subr.mxu0 0.0
    %1930 = vmatpush2.msra.mxu0 0.0
    %1931 = vmatprep.subr.mxu0 0.0
    %1932 = vmatpush2.msra.mxu0 0.0
    %1933 = vmatprep.subr.mxu0 0.0
    %1934 = vmatpush2.msra.mxu0 0.0
    %1935 = vmatprep.subr.mxu0 0.0
    %1936 = vmatpush2.msra.mxu0 0.0
    %1937 = vmatprep.subr.mxu0 0.0
    %1938 = vmatpush2.msra.mxu0 0.0
    %1939 = vmatprep.subr.mxu0 0.0
    %1940 = vmatpush2.msra.mxu0 0.0
    %1941 = vmatprep.subr.mxu0 0.0
    %1942 = vmatpush2.msra.mxu0 0.0
    %1943 = vmatprep.subr.mxu0 0.0
    %1944 = vmatpush2.msra.mxu0 0.0
    %1945 = vmatprep.subr.mxu0 0.0
    %1946 = vmatpush2.msra.mxu0 0.0
    %1947 = vmatprep.subr.mxu0 0.0
    %1948 = vmatpush2.msra.mxu0 0.0
    %1949 = vmatprep.subr.mxu0 0.0
    %1950 = vmatpush2.msra.mxu0 0.0
    %1951 = vmatprep.subr.mxu0 0.0
    %1952 = vmatpush2.msra.mxu0 0.0
    %1953 = vmatprep.subr.mxu0 0.0
    %1954 = vmatpush2.msra.mxu0 0.0
    %1955 = vmatprep.subr.mxu0 0.0
    %1956 = vmatpush2.msra.mxu0 0.0
    %1957 = vmatprep.subr.mxu0 0.0
    %1958 = vmatpush2.msra.mxu0 0.0
    %1959 = vmatprep.mubr.f32.mxu0 0.0
    %1960 = vmatmul.mubr.f32.gmra.mxu0 %v1893
    %v1961 = vpop.f32.mrf.mxu0
    %v1962 = vadd.f32 0.0, %v1961
    %v1963 = vpop.f32.mrf.mxu0
    %1964 = vdwg.mxu0
    %v1965 = vadd.f32 %v1617, %v1962
    %v1966 = vxor.u32 %v1965, 2147483648
    %v1967 = vmul.f32 %v1966, 1.442695
    %v1968 = vpow.pop %v1967
    %v1969 = vadd.f32 %v1968, 1.0
    %v1970 = vrcp.pop %v1969
    %v1971 = vmul.f32 1.0, %v1970
    %v1972 = vtanh.pop %v1965
    %v1973 = vmul.f32 %v1971, %v1713
    %1975 = vrot.lane.b32.xlu0 %v1972, 64
    %v1976 = vpop.permute.xlu0 %1975
    %v1978 = vmul.f32 %v1971, %v1976
    %1980 = vrot.lane.b32.xlu0 %v1978, 32
    %v1981 = vpop.permute.xlu0 %1980
    %v1983 = vadd.f32 %v1973, %v1981
    %v1984 = vtanh.pop %v1983
    %1986 = vrot.lane.b32.xlu0 %v1984, 64
    %v1987 = vpop.permute.xlu0 %1986
    %v1989 = vmul.f32 %v1971, %v1987
    %1990 = vmatprep.subr.mxu0 0.0
    %1991 = vmatpush1.msra.mxu0 0.0
    %1992 = vmatprep.subr.mxu0 0.0
    %1993 = vmatpush1.msra.mxu0 0.0
    %1994 = vmatprep.subr.mxu0 0.0
    %1995 = vmatpush1.msra.mxu0 0.0
    %1996 = vmatprep.subr.mxu0 0.0
    %1997 = vmatpush1.msra.mxu0 0.0
    %1998 = vmatprep.subr.mxu0 0.0
    %1999 = vmatpush1.msra.mxu0 0.0
    %2000 = vmatprep.subr.mxu0 0.0
    %2001 = vmatpush1.msra.mxu0 0.0
    %2002 = vmatprep.subr.mxu0 0.0
    %2003 = vmatpush1.msra.mxu0 0.0
    %2004 = vmatprep.subr.mxu0 0.0
    %2005 = vmatpush1.msra.mxu0 0.0
    %2006 = vmatprep.subr.mxu0 0.0
    %2007 = vmatpush1.msra.mxu0 0.0
    %2008 = vmatprep.subr.mxu0 0.0
    %2009 = vmatpush1.msra.mxu0 0.0
    %2010 = vmatprep.subr.mxu0 0.0
    %2011 = vmatpush1.msra.mxu0 0.0
    %2012 = vmatprep.subr.mxu0 0.0
    %2013 = vmatpush1.msra.mxu0 0.0
    %2014 = vmatprep.subr.mxu0 0.0
    %2015 = vmatpush1.msra.mxu0 %v56
    %2016 = vmatprep.subr.mxu0 0.0
    %2017 = vmatpush1.msra.mxu0 %v55
    %2018 = vmatprep.subr.mxu0 0.0
    %2019 = vmatpush1.msra.mxu0 %v54
    %2020 = vmatprep.subr.mxu0 0.0
    %2021 = vmatpush1.msra.mxu0 %v53
    %2022 = vmatprep.subr.mxu0 0.0
    %2023 = vmatpush2.msra.mxu0 0.0
    %2024 = vmatprep.subr.mxu0 0.0
    %2025 = vmatpush2.msra.mxu0 0.0
    %2026 = vmatprep.subr.mxu0 0.0
    %2027 = vmatpush2.msra.mxu0 0.0
    %2028 = vmatprep.subr.mxu0 0.0
    %2029 = vmatpush2.msra.mxu0 0.0
    %2030 = vmatprep.subr.mxu0 0.0
    %2031 = vmatpush2.msra.mxu0 0.0
    %2032 = vmatprep.subr.mxu0 0.0
    %2033 = vmatpush2.msra.mxu0 0.0
    %2034 = vmatprep.subr.mxu0 0.0
    %2035 = vmatpush2.msra.mxu0 0.0
    %2036 = vmatprep.subr.mxu0 0.0
    %2037 = vmatpush2.msra.mxu0 0.0
    %2038 = vmatprep.subr.mxu0 0.0
    %2039 = vmatpush2.msra.mxu0 0.0
    %2040 = vmatprep.subr.mxu0 0.0
    %2041 = vmatpush2.msra.mxu0 0.0
    %2042 = vmatprep.subr.mxu0 0.0
    %2043 = vmatpush2.msra.mxu0 0.0
    %2044 = vmatprep.subr.mxu0 0.0
    %2045 = vmatpush2.msra.mxu0 0.0
    %2046 = vmatprep.subr.mxu0 0.0
    %2047 = vmatpush2.msra.mxu0 0.0
    %2048 = vmatprep.subr.mxu0 0.0
    %2049 = vmatpush2.msra.mxu0 0.0
    %2050 = vmatprep.subr.mxu0 0.0
    %2051 = vmatpush2.msra.mxu0 0.0
    %2052 = vmatprep.subr.mxu0 0.0
    %2053 = vmatpush2.msra.mxu0 0.0
    %2054 = vmatprep.mubr.f32.mxu0 0.0
    %2055 = vmatmul.mubr.f32.gmra.mxu0 %v1818
    %v2056 = vpop.f32.mrf.mxu0
    %v2057 = vadd.f32 0.0, %v2056
    %v2058 = vpop.f32.mrf.mxu0
    %2059 = vdwg.mxu0
    %v2060 = vadd.f32 %v196, %v2057
    %v2061 = vxor.u32 %v2060, 2147483648
    %v2062 = vmul.f32 %v2061, 1.442695
    %v2063 = vpow.pop %v2062
    %v2064 = vadd.f32 %v2063, 1.0
    %v2065 = vrcp.pop %v2064
    %v2066 = vmul.f32 1.0, %v2065
    %v2067 = vtanh.pop %v2060
    %v2068 = vmul.f32 %v2066, %v1808
    %2070 = vrot.lane.b32.xlu0 %v2067, 64
    %v2071 = vpop.permute.xlu0 %2070
    %v2073 = vmul.f32 %v2066, %v2071
    %2075 = vrot.lane.b32.xlu0 %v2073, 32
    %v2076 = vpop.permute.xlu0 %2075
    %v2078 = vadd.f32 %v2068, %v2076
    %v2079 = vtanh.pop %v2078
    %2081 = vrot.lane.b32.xlu0 %v2079, 64
    %v2082 = vpop.permute.xlu0 %2081
    %v2084 = vmul.f32 %v2066, %v2082
    %2086 = vrot.lane.b32.xlu0 %v2084, 32
    %v2087 = vpop.permute.xlu0 %2086
    %v2088 = vsel %vm201, %v2087, 0
    %2090 = vmatprep.subr.mxu0 0.0
    %2091 = vmatpush1.msra.mxu0 0.0
    %2092 = vmatprep.subr.mxu0 0.0
    %2093 = vmatpush1.msra.mxu0 0.0
    %2094 = vmatprep.subr.mxu0 0.0
    %2095 = vmatpush1.msra.mxu0 0.0
    %2096 = vmatprep.subr.mxu0 0.0
    %2097 = vmatpush1.msra.mxu0 0.0
    %2098 = vmatprep.subr.mxu0 0.0
    %2099 = vmatpush1.msra.mxu0 0.0
    %2100 = vmatprep.subr.mxu0 0.0
    %2101 = vmatpush1.msra.mxu0 0.0
    %2102 = vmatprep.subr.mxu0 0.0
    %2103 = vmatpush1.msra.mxu0 0.0
    %2104 = vmatprep.subr.mxu0 0.0
    %2105 = vmatpush1.msra.mxu0 0.0
    %2106 = vmatprep.subr.mxu0 0.0
    %2107 = vmatpush1.msra.mxu0 0.0
    %2108 = vmatprep.subr.mxu0 0.0
    %2109 = vmatpush1.msra.mxu0 0.0
    %2110 = vmatprep.subr.mxu0 0.0
    %2111 = vmatpush1.msra.mxu0 0.0
    %2112 = vmatprep.subr.mxu0 0.0
    %2113 = vmatpush1.msra.mxu0 0.0
    %2114 = vmatprep.subr.mxu0 0.0
    %2115 = vmatpush1.msra.mxu0 %v52
    %2116 = vmatprep.subr.mxu0 0.0
    %2117 = vmatpush1.msra.mxu0 %v51
    %2118 = vmatprep.subr.mxu0 0.0
    %2119 = vmatpush1.msra.mxu0 %v50
    %2120 = vmatprep.subr.mxu0 0.0
    %2121 = vmatpush1.msra.mxu0 %v49
    %2122 = vmatprep.subr.mxu0 0.0
    %2123 = vmatpush2.msra.mxu0 0.0
    %2124 = vmatprep.subr.mxu0 0.0
    %2125 = vmatpush2.msra.mxu0 0.0
    %2126 = vmatprep.subr.mxu0 0.0
    %2127 = vmatpush2.msra.mxu0 0.0
    %2128 = vmatprep.subr.mxu0 0.0
    %2129 = vmatpush2.msra.mxu0 0.0
    %2130 = vmatprep.subr.mxu0 0.0
    %2131 = vmatpush2.msra.mxu0 0.0
    %2132 = vmatprep.subr.mxu0 0.0
    %2133 = vmatpush2.msra.mxu0 0.0
    %2134 = vmatprep.subr.mxu0 0.0
    %2135 = vmatpush2.msra.mxu0 0.0
    %2136 = vmatprep.subr.mxu0 0.0
    %2137 = vmatpush2.msra.mxu0 0.0
    %2138 = vmatprep.subr.mxu0 0.0
    %2139 = vmatpush2.msra.mxu0 0.0
    %2140 = vmatprep.subr.mxu0 0.0
    %2141 = vmatpush2.msra.mxu0 0.0
    %2142 = vmatprep.subr.mxu0 0.0
    %2143 = vmatpush2.msra.mxu0 0.0
    %2144 = vmatprep.subr.mxu0 0.0
    %2145 = vmatpush2.msra.mxu0 0.0
    %2146 = vmatprep.subr.mxu0 0.0
    %2147 = vmatpush2.msra.mxu0 0.0
    %2148 = vmatprep.subr.mxu0 0.0
    %2149 = vmatpush2.msra.mxu0 0.0
    %2150 = vmatprep.subr.mxu0 0.0
    %2151 = vmatpush2.msra.mxu0 0.0
    %2152 = vmatprep.subr.mxu0 0.0
    %2153 = vmatpush2.msra.mxu0 0.0
    %2154 = vmatprep.mubr.f32.mxu0 0.0
    %2155 = vmatmul.mubr.f32.gmra.mxu0 %v2088
    %v2156 = vpop.f32.mrf.mxu0
    %v2157 = vadd.f32 %v67, %v2156
    %v2158 = vpop.f32.mrf.mxu0
    %2159 = vdwg.mxu0
    %2161 = vrot.lane.b32.xlu0 %v1989, 32
    %v2162 = vpop.permute.xlu0 %2161
    %v2163 = vsel %vm201, %v2162, 0
    %2165 = vmatprep.subr.mxu0 0.0
    %2166 = vmatpush1.msra.mxu0 0.0
    %2167 = vmatprep.subr.mxu0 0.0
    %2168 = vmatpush1.msra.mxu0 0.0
    %2169 = vmatprep.subr.mxu0 0.0
    %2170 = vmatpush1.msra.mxu0 0.0
    %2171 = vmatprep.subr.mxu0 0.0
    %2172 = vmatpush1.msra.mxu0 0.0
    %2173 = vmatprep.subr.mxu0 0.0
    %2174 = vmatpush1.msra.mxu0 0.0
    %2175 = vmatprep.subr.mxu0 0.0
    %2176 = vmatpush1.msra.mxu0 0.0
    %2177 = vmatprep.subr.mxu0 0.0
    %2178 = vmatpush1.msra.mxu0 0.0
    %2179 = vmatprep.subr.mxu0 0.0
    %2180 = vmatpush1.msra.mxu0 0.0
    %2181 = vmatprep.subr.mxu0 0.0
    %2182 = vmatpush1.msra.mxu0 0.0
    %2183 = vmatprep.subr.mxu0 0.0
    %2184 = vmatpush1.msra.mxu0 0.0
    %2185 = vmatprep.subr.mxu0 0.0
    %2186 = vmatpush1.msra.mxu0 0.0
    %2187 = vmatprep.subr.mxu0 0.0
    %2188 = vmatpush1.msra.mxu0 0.0
    %2189 = vmatprep.subr.mxu0 0.0
    %2190 = vmatpush1.msra.mxu0 %v60
    %2191 = vmatprep.subr.mxu0 0.0
    %2192 = vmatpush1.msra.mxu0 %v59
    %2193 = vmatprep.subr.mxu0 0.0
    %2194 = vmatpush1.msra.mxu0 %v58
    %2195 = vmatprep.subr.mxu0 0.0
    %2196 = vmatpush1.msra.mxu0 %v57
    %2197 = vmatprep.subr.mxu0 0.0
    %2198 = vmatpush2.msra.mxu0 0.0
    %2199 = vmatprep.subr.mxu0 0.0
    %2200 = vmatpush2.msra.mxu0 0.0
    %2201 = vmatprep.subr.mxu0 0.0
    %2202 = vmatpush2.msra.mxu0 0.0
    %2203 = vmatprep.subr.mxu0 0.0
    %2204 = vmatpush2.msra.mxu0 0.0
    %2205 = vmatprep.subr.mxu0 0.0
    %2206 = vmatpush2.msra.mxu0 0.0
    %2207 = vmatprep.subr.mxu0 0.0
    %2208 = vmatpush2.msra.mxu0 0.0
    %2209 = vmatprep.subr.mxu0 0.0
    %2210 = vmatpush2.msra.mxu0 0.0
    %2211 = vmatprep.subr.mxu0 0.0
    %2212 = vmatpush2.msra.mxu0 0.0
    %2213 = vmatprep.subr.mxu0 0.0
    %2214 = vmatpush2.msra.mxu0 0.0
    %2215 = vmatprep.subr.mxu0 0.0
    %2216 = vmatpush2.msra.mxu0 0.0
    %2217 = vmatprep.subr.mxu0 0.0
    %2218 = vmatpush2.msra.mxu0 0.0
    %2219 = vmatprep.subr.mxu0 0.0
    %2220 = vmatpush2.msra.mxu0 0.0
    %2221 = vmatprep.subr.mxu0 0.0
    %2222 = vmatpush2.msra.mxu0 0.0
    %2223 = vmatprep.subr.mxu0 0.0
    %2224 = vmatpush2.msra.mxu0 0.0
    %2225 = vmatprep.subr.mxu0 0.0
    %2226 = vmatpush2.msra.mxu0 0.0
    %2227 = vmatprep.subr.mxu0 0.0
    %2228 = vmatpush2.msra.mxu0 0.0
    %2229 = vmatprep.mubr.f32.mxu0 0.0
    %2230 = vmatmul.mubr.f32.gmra.mxu0 %v2163
    %v2231 = vpop.f32.mrf.mxu0
    %v2232 = vadd.f32 0.0, %v2231
    %v2233 = vpop.f32.mrf.mxu0
    %2234 = vdwg.mxu0
    %v2235 = vadd.f32 %v1887, %v2232
    %v2236 = vxor.u32 %v2235, 2147483648
    %v2237 = vmul.f32 %v2236, 1.442695
    %v2238 = vpow.pop %v2237
    %v2239 = vadd.f32 %v2238, 1.0
    %v2240 = vrcp.pop %v2239
    %v2241 = vmul.f32 1.0, %v2240
    %v2242 = vtanh.pop %v2235
    %v2243 = vmul.f32 %v2241, %v1983
    %2245 = vrot.lane.b32.xlu0 %v2242, 64
    %v2246 = vpop.permute.xlu0 %2245
    %v2248 = vmul.f32 %v2241, %v2246
    %2250 = vrot.lane.b32.xlu0 %v2248, 32
    %v2251 = vpop.permute.xlu0 %2250
    %v2253 = vadd.f32 %v2243, %v2251
    %v2254 = vtanh.pop %v2253
    %2256 = vrot.lane.b32.xlu0 %v2254, 64
    %v2257 = vpop.permute.xlu0 %2256
    %v2259 = vmul.f32 %v2241, %v2257
    %2261 = vrot.lane.b32.xlu0 %v2259, 32
    %v2262 = vpop.permute.xlu0 %2261
    %v2263 = vsel %vm201, %v2262, 0
    %2265 = vmatprep.subr.mxu0 0.0
    %2266 = vmatpush1.msra.mxu0 0.0
    %2267 = vmatprep.subr.mxu0 0.0
    %2268 = vmatpush1.msra.mxu0 0.0
    %2269 = vmatprep.subr.mxu0 0.0
    %2270 = vmatpush1.msra.mxu0 0.0
    %2271 = vmatprep.subr.mxu0 0.0
    %2272 = vmatpush1.msra.mxu0 0.0
    %2273 = vmatprep.subr.mxu0 0.0
    %2274 = vmatpush1.msra.mxu0 0.0
    %2275 = vmatprep.subr.mxu0 0.0
    %2276 = vmatpush1.msra.mxu0 0.0
    %2277 = vmatprep.subr.mxu0 0.0
    %2278 = vmatpush1.msra.mxu0 0.0
    %2279 = vmatprep.subr.mxu0 0.0
    %2280 = vmatpush1.msra.mxu0 0.0
    %2281 = vmatprep.subr.mxu0 0.0
    %2282 = vmatpush1.msra.mxu0 0.0
    %2283 = vmatprep.subr.mxu0 0.0
    %2284 = vmatpush1.msra.mxu0 0.0
    %2285 = vmatprep.subr.mxu0 0.0
    %2286 = vmatpush1.msra.mxu0 0.0
    %2287 = vmatprep.subr.mxu0 0.0
    %2288 = vmatpush1.msra.mxu0 0.0
    %2289 = vmatprep.subr.mxu0 0.0
    %2290 = vmatpush1.msra.mxu0 %v60
    %2291 = vmatprep.subr.mxu0 0.0
    %2292 = vmatpush1.msra.mxu0 %v59
    %2293 = vmatprep.subr.mxu0 0.0
    %2294 = vmatpush1.msra.mxu0 %v58
    %2295 = vmatprep.subr.mxu0 0.0
    %2296 = vmatpush1.msra.mxu0 %v57
    %2297 = vmatprep.subr.mxu0 0.0
    %2298 = vmatpush2.msra.mxu0 0.0
    %2299 = vmatprep.subr.mxu0 0.0
    %2300 = vmatpush2.msra.mxu0 0.0
    %2301 = vmatprep.subr.mxu0 0.0
    %2302 = vmatpush2.msra.mxu0 0.0
    %2303 = vmatprep.subr.mxu0 0.0
    %2304 = vmatpush2.msra.mxu0 0.0
    %2305 = vmatprep.subr.mxu0 0.0
    %2306 = vmatpush2.msra.mxu0 0.0
    %2307 = vmatprep.subr.mxu0 0.0
    %2308 = vmatpush2.msra.mxu0 0.0
    %2309 = vmatprep.subr.mxu0 0.0
    %2310 = vmatpush2.msra.mxu0 0.0
    %2311 = vmatprep.subr.mxu0 0.0
    %2312 = vmatpush2.msra.mxu0 0.0
    %2313 = vmatprep.subr.mxu0 0.0
    %2314 = vmatpush2.msra.mxu0 0.0
    %2315 = vmatprep.subr.mxu0 0.0
    %2316 = vmatpush2.msra.mxu0 0.0
    %2317 = vmatprep.subr.mxu0 0.0
    %2318 = vmatpush2.msra.mxu0 0.0
    %2319 = vmatprep.subr.mxu0 0.0
    %2320 = vmatpush2.msra.mxu0 0.0
    %2321 = vmatprep.subr.mxu0 0.0
    %2322 = vmatpush2.msra.mxu0 0.0
    %2323 = vmatprep.subr.mxu0 0.0
    %2324 = vmatpush2.msra.mxu0 0.0
    %2325 = vmatprep.subr.mxu0 0.0
    %2326 = vmatpush2.msra.mxu0 0.0
    %2327 = vmatprep.subr.mxu0 0.0
    %2328 = vmatpush2.msra.mxu0 0.0
    %2329 = vmatprep.mubr.f32.mxu0 0.0
    %2330 = vmatmul.mubr.f32.gmra.mxu0 %v2263
    %v2331 = vpop.f32.mrf.mxu0
    %v2332 = vadd.f32 0.0, %v2331
    %v2333 = vpop.f32.mrf.mxu0
    %2334 = vdwg.mxu0
    %v2335 = vadd.f32 %v2157, %v2332
    %v2336 = vxor.u32 %v2335, 2147483648
    %v2337 = vmul.f32 %v2336, 1.442695
    %v2338 = vpow.pop %v2337
    %v2339 = vadd.f32 %v2338, 1.0
    %v2340 = vrcp.pop %v2339
    %v2341 = vmul.f32 1.0, %v2340
    %v2342 = vtanh.pop %v2335
    %v2343 = vmul.f32 %v2341, %v2253
    %2345 = vrot.lane.b32.xlu0 %v2342, 64
    %v2346 = vpop.permute.xlu0 %2345
    %v2348 = vmul.f32 %v2341, %v2346
    %2350 = vrot.lane.b32.xlu0 %v2348, 32
    %v2351 = vpop.permute.xlu0 %2350
    %v2353 = vadd.f32 %v2343, %v2351
    %v2354 = vtanh.pop %v2353
    %2356 = vrot.lane.b32.xlu0 %v2354, 64
    %v2357 = vpop.permute.xlu0 %2356
    %v2359 = vmul.f32 %v2341, %v2357
    %v2360 = vld [vmem:[%s7] sm:$0xff]
    %v2361 = vld [vmem:[%s7 + $0x8] sm:$0xff]
    %v2362 = vld [vmem:[%s7 + $0x10] sm:$0xff]
    %v2363 = vld [vmem:[%s7 + $0x18] sm:$0xff]
    %v2364 = vld [vmem:[#allocation2] sm:$0x1]
    %v2366 = vlaneseq
    %v2367 = vshrl.u32 %v2366, 7
    %v2368 = vsub.s32 0, %v2367
    %v2369 = vrot.slane %v2364, %v2368
    %2372 = vrot.lane.b32.xlu0 %v2359, 32
    %v2373 = vpop.permute.xlu0 %2372
    %v2374 = vsel %vm201, %v2373, 0
    %2376 = vmatprep.subr.mxu0 0.0
    %2377 = vmatpush1.msra.mxu0 0.0
    %2378 = vmatprep.subr.mxu0 0.0
    %2379 = vmatpush1.msra.mxu0 0.0
    %2380 = vmatprep.subr.mxu0 0.0
    %2381 = vmatpush1.msra.mxu0 0.0
    %2382 = vmatprep.subr.mxu0 0.0
    %2383 = vmatpush1.msra.mxu0 0.0
    %2384 = vmatprep.subr.mxu0 0.0
    %2385 = vmatpush1.msra.mxu0 0.0
    %2386 = vmatprep.subr.mxu0 0.0
    %2387 = vmatpush1.msra.mxu0 0.0
    %2388 = vmatprep.subr.mxu0 0.0
    %2389 = vmatpush1.msra.mxu0 0.0
    %2390 = vmatprep.subr.mxu0 0.0
    %2391 = vmatpush1.msra.mxu0 0.0
    %2392 = vmatprep.subr.mxu0 0.0
    %2393 = vmatpush1.msra.mxu0 0.0
    %2394 = vmatprep.subr.mxu0 0.0
    %2395 = vmatpush1.msra.mxu0 0.0
    %2396 = vmatprep.subr.mxu0 0.0
    %2397 = vmatpush1.msra.mxu0 0.0
    %2398 = vmatprep.subr.mxu0 0.0
    %2399 = vmatpush1.msra.mxu0 0.0
    %2400 = vmatprep.subr.mxu0 0.0
    %2401 = vmatpush1.msra.mxu0 %v2363
    %2402 = vmatprep.subr.mxu0 0.0
    %2403 = vmatpush1.msra.mxu0 %v2362
    %2404 = vmatprep.subr.mxu0 0.0
    %2405 = vmatpush1.msra.mxu0 %v2361
    %2406 = vmatprep.subr.mxu0 0.0
    %2407 = vmatpush1.msra.mxu0 %v2360
    %2408 = vmatprep.subr.mxu0 0.0
    %2409 = vmatpush2.msra.mxu0 0.0
    %2410 = vmatprep.subr.mxu0 0.0
    %2411 = vmatpush2.msra.mxu0 0.0
    %2412 = vmatprep.subr.mxu0 0.0
    %2413 = vmatpush2.msra.mxu0 0.0
    %2414 = vmatprep.subr.mxu0 0.0
    %2415 = vmatpush2.msra.mxu0 0.0
    %2416 = vmatprep.subr.mxu0 0.0
    %2417 = vmatpush2.msra.mxu0 0.0
    %2418 = vmatprep.subr.mxu0 0.0
    %2419 = vmatpush2.msra.mxu0 0.0
    %2420 = vmatprep.subr.mxu0 0.0
    %2421 = vmatpush2.msra.mxu0 0.0
    %2422 = vmatprep.subr.mxu0 0.0
    %2423 = vmatpush2.msra.mxu0 0.0
    %2424 = vmatprep.subr.mxu0 0.0
    %2425 = vmatpush2.msra.mxu0 0.0
    %2426 = vmatprep.subr.mxu0 0.0
    %2427 = vmatpush2.msra.mxu0 0.0
    %2428 = vmatprep.subr.mxu0 0.0
    %2429 = vmatpush2.msra.mxu0 0.0
    %2430 = vmatprep.subr.mxu0 0.0
    %2431 = vmatpush2.msra.mxu0 0.0
    %2432 = vmatprep.subr.mxu0 0.0
    %2433 = vmatpush2.msra.mxu0 0.0
    %2434 = vmatprep.subr.mxu0 0.0
    %2435 = vmatpush2.msra.mxu0 0.0
    %2436 = vmatprep.subr.mxu0 0.0
    %2437 = vmatpush2.msra.mxu0 0.0
    %2438 = vmatprep.subr.mxu0 0.0
    %2439 = vmatpush2.msra.mxu0 0.0
    %2440 = vmatprep.mubr.f32.mxu0 0.0
    %2441 = vmatmul.mubr.f32.gmra.mxu0 %v2374
    %v2442 = vpop.f32.mrf.mxu0
    %v2443 = vadd.f32 %v2369, %v2442
    %v2444 = vpop.f32.mrf.mxu0
    %2445 = vdwg.mxu0
    %vm2446 = vcmask 3072
    %2447 = vst.msk [vmem:[%s9] sm:$0xf] %vm2446, %v2443
    // Predicated region
    $region42: #{forex_lstm_forward.1} parent=1 // pred_check
      _
    $region43: #{forex_lstm_forward.1} parent=1 // pred_check_branch
      %2449 = sbr.rel (0) target = $region45
    $region44: #{forex_lstm_forward.1} parent=1 // pred_region
      _
    $region45: #{forex_lstm_forward.1} parent=1 // pred_fallthru
      _
    // Predicated region
    $region46: #{forex_lstm_forward.1} parent=1 // pred_check
      _
    $region47: #{forex_lstm_forward.1} parent=1 // pred_check_branch
      %2451 = sbr.rel (0) target = $region49
    $region48: #{forex_lstm_forward.1} parent=1 // pred_region
      _
    $region49: #{forex_lstm_forward.1} parent=1 // pred_fallthru
      _
    %2452 = vsyncpa [#allocation4], 1

</llo_original>
